<compile_context>
chip_gen: v5e
topology: v5e:2x2
jax: 0.10.0
libtpu: 0.0.40
codegen_flags: <defaults>
</compile_context>

<pallas_src>
import functools

import jax
import jax.numpy as jnp
from jax import lax
from jax.experimental import pallas as pl
from jax.experimental.pallas import tpu as pltpu


D_IN = 768          # 24 * 16 * 2, flattened input/output feature size
LATENT = 20         # encoder output width (mu | logvar)
LATENT_HALF = 10


def _vae_kernel(x_ref,
                w1_ref, b1_ref, w2_ref, b2_ref, w3_ref, b3_ref,
                w4_ref, b4_ref, w5_ref, b5_ref, w6_ref, b6_ref,
                xhat_ref, kld_rows_ref, *, bs, tile_b):
    """One batch tile: full encoder + KLD partials + decoder.

    x_ref:        (tile_b, 768) bf16
    w*_ref:       (in, out) bf16  (resident across the grid)
    b*_ref:       (1, out)  f32
    xhat_ref:     (tile_b, 768) f32
    kld_rows_ref: (tile_b, 1)   f32  per-row KLD sums (padded rows -> 0)
    """

    def dense_relu(a_bf16, w_ref, b_ref):
        y = jnp.dot(a_bf16, w_ref[...], preferred_element_type=jnp.float32)
        return jnp.maximum(y + b_ref[...], 0.0)          # f32 epilogue

    x = x_ref[...]                                        # (tile_b, 768) bf16

    # ---- encoder: 768 -> 256 -> 64 -> 20, ReLU after each layer
    h1 = dense_relu(x, w1_ref, b1_ref)
    h2 = dense_relu(h1.astype(jnp.bfloat16), w2_ref, b2_ref)
    h = dense_relu(h2.astype(jnp.bfloat16), w3_ref, b3_ref)   # (tile_b, 20) f32

    # ---- KLD per-row partial sums on the full 20-wide slab (no mu/logvar slicing).
    # torch: 0.5 * mean(mu^2 + logvar^2 - log(1e-8 + logvar^2) - 1)
    #   sum over the 20 columns of:
    #     col <  10 (mu)    : mu^2
    #     col >= 10 (logvar): logvar^2 - log(1e-8 + logvar^2) - 1
    # TODO(synk): z = mu + logvar * randn_like(logvar) in the torch module is dead
    # code (never used); it is intentionally not reproduced here.
    sq = h * h
    col = lax.broadcasted_iota(jnp.int32, (tile_b, LATENT), 1)
    contrib = jnp.where(col < LATENT_HALF, sq, sq - jnp.log(1e-8 + sq) - 1.0)
    row_sum = jnp.sum(contrib, axis=1, keepdims=True)          # (tile_b, 1)

    # mask out padded batch rows so the wrapper can just sum everything
    row = (pl.program_id(0) * tile_b
           + lax.broadcasted_iota(jnp.int32, (tile_b, 1), 0))
    kld_rows_ref[...] = jnp.where(row < bs, row_sum, 0.0)

    # ---- decoder: 20 -> 64 -> 256 -> 768, ReLU, ReLU, Sigmoid
    d1 = dense_relu(h.astype(jnp.bfloat16), w4_ref, b4_ref)
    d2 = dense_relu(d1.astype(jnp.bfloat16), w5_ref, b5_ref)
    logits = (jnp.dot(d2.astype(jnp.bfloat16), w6_ref[...],
                      preferred_element_type=jnp.float32) + b6_ref[...])
    # sigmoid = 1 / (1 + exp(-x)); exp and approx reciprocal both run on the EUP.
    xhat_ref[...] = pl.reciprocal(1.0 + jnp.exp(-logits), approx=True)


@functools.partial(jax.jit, static_argnames=("tile_b",))
def vae_forward(x, params, tile_b=256):
    """x: (bs, 24, 16, 2) float32. Returns (x_hat (bs, 24, 16, 2) f32, kld scalar f32)."""
    bs = x.shape[0]
    x_flat = x.reshape(bs, -1).astype(jnp.bfloat16)            # (bs, 768) bf16

    # --- choose batch tile: multiple of 8 sublanes, capped at tile_b,
    #     small enough that (weights + double-buffered tiles + f32 intermediates)
    #     fits comfortably under the 64 MiB v7x VMEM (at tile_b=256 it is ~6 MiB).
    if bs <= tile_b:
        tb = max(8, ((bs + 7) // 8) * 8)
    else:
        tb = tile_b
    bs_pad = ((bs + tb - 1) // tb) * tb
    if bs_pad != bs:
        x_flat = jnp.pad(x_flat, ((0, bs_pad - bs), (0, 0)))
    num_tiles = bs_pad // tb

    # weights (even indices) -> bf16 for the MXU; biases stay f32 for the epilogue
    ops = tuple(p.astype(jnp.bfloat16) if i % 2 == 0 else p.astype(jnp.float32)
                for i, p in enumerate(params))

    x_spec = pl.BlockSpec((tb, D_IN), lambda i: (i, 0))
    param_specs = [pl.BlockSpec(p.shape, lambda i: (0, 0)) for p in ops]  # resident
    xhat_spec = pl.BlockSpec((tb, D_IN), lambda i: (i, 0))
    kld_spec = pl.BlockSpec((tb, 1), lambda i: (i, 0))

    kernel = functools.partial(_vae_kernel, bs=bs, tile_b=tb)

    x_hat_pad, kld_rows = pl.pallas_call(
        kernel,
        grid=(num_tiles,),
        out_shape=(
            jax.ShapeDtypeStruct((bs_pad, D_IN), jnp.float32),
            jax.ShapeDtypeStruct((bs_pad, 1), jnp.float32),
        ),
        in_specs=[x_spec] + param_specs,
        out_specs=(xhat_spec, kld_spec),
        compiler_params=pltpu.CompilerParams(
            dimension_semantics=("parallel",),
            vmem_limit_bytes=32 * 1024 * 1024,
        ),
    )(x_flat, *ops)

    x_hat = x_hat_pad[:bs].reshape(bs, 24, 16, 2)
    # padded rows were zeroed in-kernel, so a plain sum is exact
    kld = 0.5 * jnp.sum(kld_rows) / (bs * LATENT_HALF)
    return x_hat, kld


def init_params(key):
    """PyTorch-style Linear init: U(-1/sqrt(fan_in), 1/sqrt(fan_in)).
    Weights stored as (in, out) so the kernel computes x @ W + b."""
    dims = [(768, 256), (256, 64), (64, 20),      # encoder
            (20, 64), (64, 256), (256, 768)]      # decoder
    params = []
    for fan_in, fan_out in dims:
        key, kw, kb = jax.random.split(key, 3)
        bound = 1.0 / (fan_in ** 0.5)
        w = jax.random.uniform(kw, (fan_in, fan_out), jnp.float32, -bound, bound)
        b = jax.random.uniform(kb, (1, fan_out), jnp.float32, -bound, bound)
        params += [w, b]
    return tuple(params)


def _reference(x, params):
    """Pure-JAX reference with matching bf16-matmul / f32-epilogue numerics."""
    bs = x.shape[0]
    (w1, b1, w2, b2, w3, b3, w4, b4, w5, b5, w6, b6) = params

    def dense(a, w, b):
        return jnp.dot(a.astype(jnp.bfloat16), w.astype(jnp.bfloat16),
                       preferred_element_type=jnp.float32) + b

    h = x.reshape(bs, -1)
    h = jnp.maximum(dense(h, w1, b1), 0.0)
    h = jnp.maximum(dense(h, w2, b2), 0.0)
    h = jnp.maximum(dense(h, w3, b3), 0.0)
    mu, logvar = h[:, :10], h[:, 10:20]
    lv2 = logvar ** 2
    kld = 0.5 * jnp.mean(mu ** 2 + lv2 - jnp.log(1e-8 + lv2) - 1.0)
    d = jnp.maximum(dense(h, w4, b4), 0.0)
    d = jnp.maximum(dense(d, w5, b5), 0.0)
    x_hat = jax.nn.sigmoid(dense(d, w6, b6))
    return x_hat.reshape(bs, 24, 16, 2), kld


if __name__ == "__main__":
    key = jax.random.PRNGKey(0)
    key, kx = jax.random.split(key)
    params = init_params(key)

    # --- small single-tile case (batch padded 4 -> 8 sublanes)
    bs = 4
    x = jax.random.uniform(kx, (bs, 24, 16, 2), jnp.float32)
    x_hat, kld = vae_forward(x, params)
    jax.block_until_ready((x_hat, kld))

    x_hat_ref, kld_ref = _reference(x, params)
    assert x_hat.shape == (bs, 24, 16, 2)
    assert jnp.allclose(x_hat, x_hat_ref, atol=1e-2), "x_hat mismatch (bs=4)"
    assert jnp.allclose(kld, kld_ref, atol=1e-3, rtol=1e-3), "kld mismatch (bs=4)"

    # --- multi-tile case exercising the batch grid, resident weights and padding mask
    key, kx2 = jax.random.split(key)
    bs2 = 300
    x2 = jax.random.uniform(kx2, (bs2, 24, 16, 2), jnp.float32)
    x_hat2, kld2 = vae_forward(x2, params, tile_b=128)   # 3 tiles of 128, 84 padded rows
    jax.block_until_ready((x_hat2, kld2))

    x_hat2_ref, kld2_ref = _reference(x2, params)
    assert jnp.allclose(x_hat2, x_hat2_ref, atol=1e-2), "x_hat mismatch (bs=300)"
    assert jnp.allclose(kld2, kld2_ref, atol=1e-3, rtol=1e-3), "kld mismatch (bs=300)"

    print("KERNEL_OK")
</pallas_src>

<mosaic_0001>
module attributes {stable_mosaic.version = 11 : i64} {
  func.func @_vae_kernel(%arg0: i32, %arg1: memref<8x768xbf16, #tpu.memory_space<vmem>>, %arg2: memref<768x256xbf16, #tpu.memory_space<vmem>>, %arg3: memref<1x256xf32, #tpu.memory_space<vmem>>, %arg4: memref<256x64xbf16, #tpu.memory_space<vmem>>, %arg5: memref<1x64xf32, #tpu.memory_space<vmem>>, %arg6: memref<64x20xbf16, #tpu.memory_space<vmem>>, %arg7: memref<1x20xf32, #tpu.memory_space<vmem>>, %arg8: memref<20x64xbf16, #tpu.memory_space<vmem>>, %arg9: memref<1x64xf32, #tpu.memory_space<vmem>>, %arg10: memref<64x256xbf16, #tpu.memory_space<vmem>>, %arg11: memref<1x256xf32, #tpu.memory_space<vmem>>, %arg12: memref<256x768xbf16, #tpu.memory_space<vmem>>, %arg13: memref<1x768xf32, #tpu.memory_space<vmem>>, %arg14: memref<8x768xf32, #tpu.memory_space<vmem>>, %arg15: memref<8x1xf32, #tpu.memory_space<vmem>>) attributes {dimension_semantics = [#tpu.dimension_semantics<parallel>], iteration_bounds = array<i64: 1>, scalar_prefetch = 0 : i64, scratch_operands = 0 : i64, tpu.core_type = #tpu.core_type<tc>, window_params = [{transform_indices = @transform_0, window_bounds = array<i64: 8, 768>}, {pipeline_mode = #tpu.pipeline_mode<synchronous>, transform_indices = @transform_1, window_bounds = array<i64: 768, 256>}, {pipeline_mode = #tpu.pipeline_mode<synchronous>, transform_indices = @transform_2, window_bounds = array<i64: 1, 256>}, {pipeline_mode = #tpu.pipeline_mode<synchronous>, transform_indices = @transform_3, window_bounds = array<i64: 256, 64>}, {pipeline_mode = #tpu.pipeline_mode<synchronous>, transform_indices = @transform_4, window_bounds = array<i64: 1, 64>}, {pipeline_mode = #tpu.pipeline_mode<synchronous>, transform_indices = @transform_5, window_bounds = array<i64: 64, 20>}, {pipeline_mode = #tpu.pipeline_mode<synchronous>, transform_indices = @transform_6, window_bounds = array<i64: 1, 20>}, {pipeline_mode = #tpu.pipeline_mode<synchronous>, transform_indices = @transform_7, window_bounds = array<i64: 20, 64>}, {pipeline_mode = #tpu.pipeline_mode<synchronous>, transform_indices = @transform_8, window_bounds = array<i64: 1, 64>}, {pipeline_mode = #tpu.pipeline_mode<synchronous>, transform_indices = @transform_9, window_bounds = array<i64: 64, 256>}, {pipeline_mode = #tpu.pipeline_mode<synchronous>, transform_indices = @transform_10, window_bounds = array<i64: 1, 256>}, {pipeline_mode = #tpu.pipeline_mode<synchronous>, transform_indices = @transform_11, window_bounds = array<i64: 256, 768>}, {pipeline_mode = #tpu.pipeline_mode<synchronous>, transform_indices = @transform_12, window_bounds = array<i64: 1, 768>}, {transform_indices = @transform_13, window_bounds = array<i64: 8, 768>}, {transform_indices = @transform_14, window_bounds = array<i64: 8, 1>}]} {
    %c0 = arith.constant 0 : index
    %c0_0 = arith.constant 0 : index
    %0 = vector.load %arg1[%c0, %c0_0] : memref<8x768xbf16, #tpu.memory_space<vmem>>, vector<8x768xbf16>
    %c0_1 = arith.constant 0 : index
    %c0_2 = arith.constant 0 : index
    %1 = vector.load %arg2[%c0_1, %c0_2] : memref<768x256xbf16, #tpu.memory_space<vmem>>, vector<768x256xbf16>
    %cst = arith.constant dense<0.000000e+00> : vector<8x256xf32>
    %2 = tpu.matmul %0, %1, %cst {dimension_numbers = #tpu.dot_dimension_numbers<[1], [0], [0], [1], [0, 0, 1, 1], [], []>} : vector<8x768xbf16>, vector<768x256xbf16>, vector<8x256xf32> -> vector<8x256xf32>
    %c0_3 = arith.constant 0 : index
    %c0_4 = arith.constant 0 : index
    %3 = vector.load %arg3[%c0_3, %c0_4] : memref<1x256xf32, #tpu.memory_space<vmem>>, vector<1x256xf32>
    %4 = vector.broadcast %3 : vector<1x256xf32> to vector<8x256xf32>
    %5 = arith.addf %2, %4 : vector<8x256xf32>
    %cst_5 = arith.constant 0.000000e+00 : f32
    %6 = vector.broadcast %cst_5 : f32 to vector<8x256xf32>
    %7 = arith.maximumf %5, %6 : vector<8x256xf32>
    %8 = arith.truncf %7 : vector<8x256xf32> to vector<8x256xbf16>
    %c0_6 = arith.constant 0 : index
    %c0_7 = arith.constant 0 : index
    %9 = vector.load %arg4[%c0_6, %c0_7] : memref<256x64xbf16, #tpu.memory_space<vmem>>, vector<256x64xbf16>
    %cst_8 = arith.constant dense<0.000000e+00> : vector<8x64xf32>
    %10 = tpu.matmul %8, %9, %cst_8 {dimension_numbers = #tpu.dot_dimension_numbers<[1], [0], [0], [1], [0, 0, 1, 1], [], []>} : vector<8x256xbf16>, vector<256x64xbf16>, vector<8x64xf32> -> vector<8x64xf32>
    %c0_9 = arith.constant 0 : index
    %c0_10 = arith.constant 0 : index
    %11 = vector.load %arg5[%c0_9, %c0_10] : memref<1x64xf32, #tpu.memory_space<vmem>>, vector<1x64xf32>
    %12 = vector.broadcast %11 : vector<1x64xf32> to vector<8x64xf32>
    %13 = arith.addf %10, %12 : vector<8x64xf32>
    %cst_11 = arith.constant 0.000000e+00 : f32
    %14 = vector.broadcast %cst_11 : f32 to vector<8x64xf32>
    %15 = arith.maximumf %13, %14 : vector<8x64xf32>
    %16 = arith.truncf %15 : vector<8x64xf32> to vector<8x64xbf16>
    %c0_12 = arith.constant 0 : index
    %c0_13 = arith.constant 0 : index
    %17 = vector.load %arg6[%c0_12, %c0_13] : memref<64x20xbf16, #tpu.memory_space<vmem>>, vector<64x20xbf16>
    %cst_14 = arith.constant dense<0.000000e+00> : vector<8x20xf32>
    %18 = tpu.matmul %16, %17, %cst_14 {dimension_numbers = #tpu.dot_dimension_numbers<[1], [0], [0], [1], [0, 0, 1, 1], [], []>} : vector<8x64xbf16>, vector<64x20xbf16>, vector<8x20xf32> -> vector<8x20xf32>
    %c0_15 = arith.constant 0 : index
    %c0_16 = arith.constant 0 : index
    %19 = vector.load %arg7[%c0_15, %c0_16] : memref<1x20xf32, #tpu.memory_space<vmem>>, vector<1x20xf32>
    %20 = vector.broadcast %19 : vector<1x20xf32> to vector<8x20xf32>
    %21 = arith.addf %18, %20 : vector<8x20xf32>
    %cst_17 = arith.constant 0.000000e+00 : f32
    %22 = vector.broadcast %cst_17 : f32 to vector<8x20xf32>
    %23 = arith.maximumf %21, %22 : vector<8x20xf32>
    %24 = arith.mulf %23, %23 : vector<8x20xf32>
    %25 = tpu.iota {dimensions = array<i32: 1>} : vector<8x20xi32>
    %c10_i32 = arith.constant 10 : i32
    %26 = vector.broadcast %c10_i32 : i32 to vector<8x20xi32>
    %27 = arith.cmpi slt, %25, %26 : vector<8x20xi32>
    %cst_18 = arith.constant 9.99999993E-9 : f32
    %28 = vector.broadcast %cst_18 : f32 to vector<8x20xf32>
    %29 = arith.addf %28, %24 : vector<8x20xf32>
    %30 = math.log %29 : vector<8x20xf32>
    %31 = arith.subf %24, %30 : vector<8x20xf32>
    %cst_19 = arith.constant 1.000000e+00 : f32
    %32 = vector.broadcast %cst_19 : f32 to vector<8x20xf32>
    %33 = arith.subf %31, %32 : vector<8x20xf32>
    %34 = arith.select %27, %24, %33 : vector<8x20xi1>, vector<8x20xf32>
    %cst_20 = arith.constant dense<0.000000e+00> : vector<8xf32>
    %35 = vector.multi_reduction <add>, %34, %cst_20 [1] : vector<8x20xf32> to vector<8xf32>
    %36 = vector.shape_cast %35 : vector<8xf32> to vector<8x1xf32>
    %c8_i32 = arith.constant 8 : i32
    %37 = arith.muli %arg0, %c8_i32 : i32
    %38 = tpu.iota {dimensions = array<i32: 0>} : vector<8x1xi32>
    %39 = vector.broadcast %37 : i32 to vector<8x1xi32>
    %40 = arith.addi %39, %38 : vector<8x1xi32>
    %c4_i32 = arith.constant 4 : i32
    %41 = vector.broadcast %c4_i32 : i32 to vector<8x1xi32>
    %42 = arith.cmpi slt, %40, %41 : vector<8x1xi32>
    %cst_21 = arith.constant 0.000000e+00 : f32
    %43 = vector.broadcast %cst_21 : f32 to vector<8x1xf32>
    %44 = arith.select %42, %36, %43 : vector<8x1xi1>, vector<8x1xf32>
    %c0_22 = arith.constant 0 : index
    %c0_23 = arith.constant 0 : index
    %45 = vector.load %arg15[%c0_22, %c0_23] : memref<8x1xf32, #tpu.memory_space<vmem>>, vector<8x1xf32>
    tpu.vector_store %arg15[%c0_22, %c0_23], %44 {strides = array<i32>} : memref<8x1xf32, #tpu.memory_space<vmem>>, vector<8x1xf32>,
    %46 = arith.truncf %23 : vector<8x20xf32> to vector<8x20xbf16>
    %c0_24 = arith.constant 0 : index
    %c0_25 = arith.constant 0 : index
    %47 = vector.load %arg8[%c0_24, %c0_25] : memref<20x64xbf16, #tpu.memory_space<vmem>>, vector<20x64xbf16>
    %cst_26 = arith.constant dense<0.000000e+00> : vector<8x64xf32>
    %48 = tpu.matmul %46, %47, %cst_26 {dimension_numbers = #tpu.dot_dimension_numbers<[1], [0], [0], [1], [0, 0, 1, 1], [], []>} : vector<8x20xbf16>, vector<20x64xbf16>, vector<8x64xf32> -> vector<8x64xf32>
    %c0_27 = arith.constant 0 : index
    %c0_28 = arith.constant 0 : index
    %49 = vector.load %arg9[%c0_27, %c0_28] : memref<1x64xf32, #tpu.memory_space<vmem>>, vector<1x64xf32>
    %50 = vector.broadcast %49 : vector<1x64xf32> to vector<8x64xf32>
    %51 = arith.addf %48, %50 : vector<8x64xf32>
    %cst_29 = arith.constant 0.000000e+00 : f32
    %52 = vector.broadcast %cst_29 : f32 to vector<8x64xf32>
    %53 = arith.maximumf %51, %52 : vector<8x64xf32>
    %54 = arith.truncf %53 : vector<8x64xf32> to vector<8x64xbf16>
    %c0_30 = arith.constant 0 : index
    %c0_31 = arith.constant 0 : index
    %55 = vector.load %arg10[%c0_30, %c0_31] : memref<64x256xbf16, #tpu.memory_space<vmem>>, vector<64x256xbf16>
    %cst_32 = arith.constant dense<0.000000e+00> : vector<8x256xf32>
    %56 = tpu.matmul %54, %55, %cst_32 {dimension_numbers = #tpu.dot_dimension_numbers<[1], [0], [0], [1], [0, 0, 1, 1], [], []>} : vector<8x64xbf16>, vector<64x256xbf16>, vector<8x256xf32> -> vector<8x256xf32>
    %c0_33 = arith.constant 0 : index
    %c0_34 = arith.constant 0 : index
    %57 = vector.load %arg11[%c0_33, %c0_34] : memref<1x256xf32, #tpu.memory_space<vmem>>, vector<1x256xf32>
    %58 = vector.broadcast %57 : vector<1x256xf32> to vector<8x256xf32>
    %59 = arith.addf %56, %58 : vector<8x256xf32>
    %cst_35 = arith.constant 0.000000e+00 : f32
    %60 = vector.broadcast %cst_35 : f32 to vector<8x256xf32>
    %61 = arith.maximumf %59, %60 : vector<8x256xf32>
    %62 = arith.truncf %61 : vector<8x256xf32> to vector<8x256xbf16>
    %c0_36 = arith.constant 0 : index
    %c0_37 = arith.constant 0 : index
    %63 = vector.load %arg12[%c0_36, %c0_37] : memref<256x768xbf16, #tpu.memory_space<vmem>>, vector<256x768xbf16>
    %cst_38 = arith.constant dense<0.000000e+00> : vector<8x768xf32>
    %64 = tpu.matmul %62, %63, %cst_38 {dimension_numbers = #tpu.dot_dimension_numbers<[1], [0], [0], [1], [0, 0, 1, 1], [], []>} : vector<8x256xbf16>, vector<256x768xbf16>, vector<8x768xf32> -> vector<8x768xf32>
    %c0_39 = arith.constant 0 : index
    %c0_40 = arith.constant 0 : index
    %65 = vector.load %arg13[%c0_39, %c0_40] : memref<1x768xf32, #tpu.memory_space<vmem>>, vector<1x768xf32>
    %66 = vector.broadcast %65 : vector<1x768xf32> to vector<8x768xf32>
    %67 = arith.addf %64, %66 : vector<8x768xf32>
    %cst_41 = arith.constant 0.000000e+00 : f32
    %68 = vector.broadcast %cst_41 : f32 to vector<8x768xf32>
    %69 = arith.subf %68, %67 : vector<8x768xf32>
    %70 = math.exp %69 : vector<8x768xf32>
    %cst_42 = arith.constant 1.000000e+00 : f32
    %71 = vector.broadcast %cst_42 : f32 to vector<8x768xf32>
    %72 = arith.addf %71, %70 : vector<8x768xf32>
    %73 = tpu.reciprocal %72 {approx = true} : vector<8x768xf32> -> vector<8x768xf32>
    %c0_43 = arith.constant 0 : index
    %c0_44 = arith.constant 0 : index
    %74 = vector.load %arg14[%c0_43, %c0_44] : memref<8x768xf32, #tpu.memory_space<vmem>>, vector<8x768xf32>
    tpu.vector_store %arg14[%c0_43, %c0_44], %73 {strides = array<i32>} : memref<8x768xf32, #tpu.memory_space<vmem>>, vector<8x768xf32>,
    return
  }
  func.func @transform_0(%arg0: i32) -> (i32, i32) {
    %c0_i32 = arith.constant 0 : i32
    %c0_i32_0 = arith.constant 0 : i32
    return %arg0, %c0_i32 : i32, i32
  }
  func.func @transform_1(%arg0: i32) -> (i32, i32) {
    %c0_i32 = arith.constant 0 : i32
    %c0_i32_0 = arith.constant 0 : i32
    %c0_i32_1 = arith.constant 0 : i32
    return %c0_i32, %c0_i32_0 : i32, i32
  }
  func.func @transform_2(%arg0: i32) -> (i32, i32) {
    %c0_i32 = arith.constant 0 : i32
    %c0_i32_0 = arith.constant 0 : i32
    %c0_i32_1 = arith.constant 0 : i32
    return %c0_i32, %c0_i32_0 : i32, i32
  }
  func.func @transform_3(%arg0: i32) -> (i32, i32) {
    %c0_i32 = arith.constant 0 : i32
    %c0_i32_0 = arith.constant 0 : i32
    %c0_i32_1 = arith.constant 0 : i32
    return %c0_i32, %c0_i32_0 : i32, i32
  }
  func.func @transform_4(%arg0: i32) -> (i32, i32) {
    %c0_i32 = arith.constant 0 : i32
    %c0_i32_0 = arith.constant 0 : i32
    %c0_i32_1 = arith.constant 0 : i32
    return %c0_i32, %c0_i32_0 : i32, i32
  }
  func.func @transform_5(%arg0: i32) -> (i32, i32) {
    %c0_i32 = arith.constant 0 : i32
    %c0_i32_0 = arith.constant 0 : i32
    %c0_i32_1 = arith.constant 0 : i32
    return %c0_i32, %c0_i32_0 : i32, i32
  }
  func.func @transform_6(%arg0: i32) -> (i32, i32) {
    %c0_i32 = arith.constant 0 : i32
    %c0_i32_0 = arith.constant 0 : i32
    %c0_i32_1 = arith.constant 0 : i32
    return %c0_i32, %c0_i32_0 : i32, i32
  }
  func.func @transform_7(%arg0: i32) -> (i32, i32) {
    %c0_i32 = arith.constant 0 : i32
    %c0_i32_0 = arith.constant 0 : i32
    %c0_i32_1 = arith.constant 0 : i32
    return %c0_i32, %c0_i32_0 : i32, i32
  }
  func.func @transform_8(%arg0: i32) -> (i32, i32) {
    %c0_i32 = arith.constant 0 : i32
    %c0_i32_0 = arith.constant 0 : i32
    %c0_i32_1 = arith.constant 0 : i32
    return %c0_i32, %c0_i32_0 : i32, i32
  }
  func.func @transform_9(%arg0: i32) -> (i32, i32) {
    %c0_i32 = arith.constant 0 : i32
    %c0_i32_0 = arith.constant 0 : i32
    %c0_i32_1 = arith.constant 0 : i32
    return %c0_i32, %c0_i32_0 : i32, i32
  }
  func.func @transform_10(%arg0: i32) -> (i32, i32) {
    %c0_i32 = arith.constant 0 : i32
    %c0_i32_0 = arith.constant 0 : i32
    %c0_i32_1 = arith.constant 0 : i32
    return %c0_i32, %c0_i32_0 : i32, i32
  }
  func.func @transform_11(%arg0: i32) -> (i32, i32) {
    %c0_i32 = arith.constant 0 : i32
    %c0_i32_0 = arith.constant 0 : i32
    %c0_i32_1 = arith.constant 0 : i32
    return %c0_i32, %c0_i32_0 : i32, i32
  }
  func.func @transform_12(%arg0: i32) -> (i32, i32) {
    %c0_i32 = arith.constant 0 : i32
    %c0_i32_0 = arith.constant 0 : i32
    %c0_i32_1 = arith.constant 0 : i32
    return %c0_i32, %c0_i32_0 : i32, i32
  }
  func.func @transform_13(%arg0: i32) -> (i32, i32) {
    %c0_i32 = arith.constant 0 : i32
    %c0_i32_0 = arith.constant 0 : i32
    return %arg0, %c0_i32 : i32, i32
  }
  func.func @transform_14(%arg0: i32) -> (i32, i32) {
    %c0_i32 = arith.constant 0 : i32
    %c0_i32_0 = arith.constant 0 : i32
    return %arg0, %c0_i32 : i32, i32
  }
}

</mosaic_0001>

<llo_original>
// kernel: vae_forward.1
$region0: #{vae_forward.1}
  #allocation0 [shape = 'u32[]', space=smem, size = 0x4, offset = 0x4, fixed_abs, tag = 'smem constant byte address 0x4 - core index']
  #allocation1 [shape = 'u32[72,128]{1,0:T(1,128)}', space=vmem, size = 0x9000, scoped, tag = 'internal scratch']
  %s0 = inlined_call_operand.vmem [shape: bf16[8,768], index: 0, kind: input, shape index: {}]
  %s1 = inlined_call_operand.vmem [shape: bf16[768,256], index: 1, kind: input, shape index: {}]
  %s2 = inlined_call_operand.vmem [shape: f32[1,256], index: 2, kind: input, shape index: {}]
  %s3 = inlined_call_operand.vmem [shape: bf16[256,64], index: 3, kind: input, shape index: {}]
  %s4 = inlined_call_operand.vmem [shape: f32[1,64], index: 4, kind: input, shape index: {}]
  %s5 = inlined_call_operand.vmem [shape: bf16[64,20], index: 5, kind: input, shape index: {}]
  %s6 = inlined_call_operand.vmem [shape: f32[1,20], index: 6, kind: input, shape index: {}]
  %s7 = inlined_call_operand.vmem [shape: bf16[20,64], index: 7, kind: input, shape index: {}]
  %s8 = inlined_call_operand.vmem [shape: f32[1,64], index: 8, kind: input, shape index: {}]
  %s9 = inlined_call_operand.vmem [shape: bf16[64,256], index: 9, kind: input, shape index: {}]
  %s10 = inlined_call_operand.vmem [shape: f32[1,256], index: 10, kind: input, shape index: {}]
  %s11 = inlined_call_operand.vmem [shape: bf16[256,768], index: 11, kind: input, shape index: {}]
  %s12 = inlined_call_operand.vmem [shape: f32[1,768], index: 12, kind: input, shape index: {}]
  %s13 = inlined_call_operand.vmem [shape: f32[8,768], index: 13, kind: output, shape index: {0}]
  %s14 = inlined_call_operand.vmem [shape: f32[8,1], index: 14, kind: output, shape index: {1}]
  %15 = xla_tuple %s13, %s14
  %s16 = sld [smem:[#allocation0]]
  $region70: #{vae_forward.1} parent=0
    _
  %s18 = ssub.s32 1, %s16
  %s19 = scalar_select 0, %s18, %s16
  // Predicated region
  $region2: #{vae_forward.1} parent=0 // pred_check
    _
  $region3: #{vae_forward.1} parent=0 // pred_check_branch
    %21 = sbr.rel (0) target = $region5
  $region4: #{vae_forward.1} parent=0 // pred_region
    _
  $region5: #{vae_forward.1} parent=0 // pred_fallthru
    _
  // Predicated region
  $region6: #{vae_forward.1} parent=0 // pred_check
    _
  $region7: #{vae_forward.1} parent=0 // pred_check_branch
    %23 = sbr.rel (0) target = $region9
  $region8: #{vae_forward.1} parent=0 // pred_region
    _
  $region9: #{vae_forward.1} parent=0 // pred_fallthru
    _
  // Predicated region
  $region10: #{vae_forward.1} parent=0 // pred_check
    _
  $region11: #{vae_forward.1} parent=0 // pred_check_branch
    %25 = sbr.rel (0) target = $region13
  $region12: #{vae_forward.1} parent=0 // pred_region
    _
  $region13: #{vae_forward.1} parent=0 // pred_fallthru
    _
  // Predicated region
  $region14: #{vae_forward.1} parent=0 // pred_check
    _
  $region15: #{vae_forward.1} parent=0 // pred_check_branch
    %27 = sbr.rel (0) target = $region17
  $region16: #{vae_forward.1} parent=0 // pred_region
    _
  $region17: #{vae_forward.1} parent=0 // pred_fallthru
    _
  // Predicated region
  $region18: #{vae_forward.1} parent=0 // pred_check
    _
  $region19: #{vae_forward.1} parent=0 // pred_check_branch
    %29 = sbr.rel (0) target = $region21
  $region20: #{vae_forward.1} parent=0 // pred_region
    _
  $region21: #{vae_forward.1} parent=0 // pred_fallthru
    _
  // Predicated region
  $region22: #{vae_forward.1} parent=0 // pred_check
    _
  $region23: #{vae_forward.1} parent=0 // pred_check_branch
    %31 = sbr.rel (0) target = $region25
  $region24: #{vae_forward.1} parent=0 // pred_region
    _
  $region25: #{vae_forward.1} parent=0 // pred_fallthru
    _
  // Predicated region
  $region26: #{vae_forward.1} parent=0 // pred_check
    _
  $region27: #{vae_forward.1} parent=0 // pred_check_branch
    %33 = sbr.rel (0) target = $region29
  $region28: #{vae_forward.1} parent=0 // pred_region
    _
  $region29: #{vae_forward.1} parent=0 // pred_fallthru
    _
  // Predicated region
  $region30: #{vae_forward.1} parent=0 // pred_check
    _
  $region31: #{vae_forward.1} parent=0 // pred_check_branch
    %35 = sbr.rel (0) target = $region33
  $region32: #{vae_forward.1} parent=0 // pred_region
    _
  $region33: #{vae_forward.1} parent=0 // pred_fallthru
    _
  // Predicated region
  $region34: #{vae_forward.1} parent=0 // pred_check
    _
  $region35: #{vae_forward.1} parent=0 // pred_check_branch
    %37 = sbr.rel (0) target = $region37
  $region36: #{vae_forward.1} parent=0 // pred_region
    _
  $region37: #{vae_forward.1} parent=0 // pred_fallthru
    _
  // Predicated region
  $region38: #{vae_forward.1} parent=0 // pred_check
    _
  $region39: #{vae_forward.1} parent=0 // pred_check_branch
    %39 = sbr.rel (0) target = $region41
  $region40: #{vae_forward.1} parent=0 // pred_region
    _
  $region41: #{vae_forward.1} parent=0 // pred_fallthru
    _
  // Predicated region
  $region42: #{vae_forward.1} parent=0 // pred_check
    _
  $region43: #{vae_forward.1} parent=0 // pred_check_branch
    %41 = sbr.rel (0) target = $region45
  $region44: #{vae_forward.1} parent=0 // pred_region
    _
  $region45: #{vae_forward.1} parent=0 // pred_fallthru
    _
  // Predicated region
  $region46: #{vae_forward.1} parent=0 // pred_check
    _
  $region47: #{vae_forward.1} parent=0 // pred_check_branch
    %43 = sbr.rel (0) target = $region49
  $region48: #{vae_forward.1} parent=0 // pred_region
    _
  $region49: #{vae_forward.1} parent=0 // pred_fallthru
    _
  // Predicated region
  $region50: #{vae_forward.1} parent=0 // pred_check
    _
  $region51: #{vae_forward.1} parent=0 // pred_check_branch
    %45 = sbr.rel (0) target = $region53
  $region52: #{vae_forward.1} parent=0 // pred_region
    _
  $region53: #{vae_forward.1} parent=0 // pred_fallthru
    _
  %v47 = vld [vmem:[%s0] sm:$0xff]
  %v48 = vld [vmem:[%s0 + $0x8] sm:$0xff]
  %v49 = vld [vmem:[%s0 + $0x10] sm:$0xff]
  %v50 = vld [vmem:[%s1] sm:$0xff]
  %v51 = vld [vmem:[%s1 + $0x8] sm:$0xff]
  %v52 = vld [vmem:[%s1 + $0x10] sm:$0xff]
  %v53 = vld [vmem:[%s1 + $0x18] sm:$0xff]
  %v54 = vld [vmem:[%s1 + $0x20] sm:$0xff]
  %v55 = vld [vmem:[%s1 + $0x28] sm:$0xff]
  %v56 = vld [vmem:[%s1 + $0x30] sm:$0xff]
  %v57 = vld [vmem:[%s1 + $0x38] sm:$0xff]
  %v58 = vld [vmem:[%s1 + $0x40] sm:$0xff]
  %v59 = vld [vmem:[%s1 + $0x48] sm:$0xff]
  %v60 = vld [vmem:[%s1 + $0x50] sm:$0xff]
  %v61 = vld [vmem:[%s1 + $0x58] sm:$0xff]
  %v62 = vld [vmem:[%s1 + $0x60] sm:$0xff]
  %v63 = vld [vmem:[%s1 + $0x68] sm:$0xff]
  %v64 = vld [vmem:[%s1 + $0x70] sm:$0xff]
  %v65 = vld [vmem:[%s1 + $0x78] sm:$0xff]
  %v66 = vld [vmem:[%s1 + $0x80] sm:$0xff]
  %v67 = vld [vmem:[%s1 + $0x88] sm:$0xff]
  %v68 = vld [vmem:[%s1 + $0x90] sm:$0xff]
  %v69 = vld [vmem:[%s1 + $0x98] sm:$0xff]
  %v70 = vld [vmem:[%s1 + $0xa0] sm:$0xff]
  %v71 = vld [vmem:[%s1 + $0xa8] sm:$0xff]
  %v72 = vld [vmem:[%s1 + $0xb0] sm:$0xff]
  %v73 = vld [vmem:[%s1 + $0xb8] sm:$0xff]
  %v74 = vld [vmem:[%s1 + $0xc0] sm:$0xff]
  %v75 = vld [vmem:[%s1 + $0xc8] sm:$0xff]
  %v76 = vld [vmem:[%s1 + $0xd0] sm:$0xff]
  %v77 = vld [vmem:[%s1 + $0xd8] sm:$0xff]
  %v78 = vld [vmem:[%s1 + $0xe0] sm:$0xff]
  %v79 = vld [vmem:[%s1 + $0xe8] sm:$0xff]
  %v80 = vld [vmem:[%s1 + $0xf0] sm:$0xff]
  %v81 = vld [vmem:[%s1 + $0xf8] sm:$0xff]
  %v82 = vld [vmem:[%s1 + $0x100] sm:$0xff]
  %v83 = vld [vmem:[%s1 + $0x108] sm:$0xff]
  %v84 = vld [vmem:[%s1 + $0x110] sm:$0xff]
  %v85 = vld [vmem:[%s1 + $0x118] sm:$0xff]
  %v86 = vld [vmem:[%s1 + $0x120] sm:$0xff]
  %v87 = vld [vmem:[%s1 + $0x128] sm:$0xff]
  %v88 = vld [vmem:[%s1 + $0x130] sm:$0xff]
  %v89 = vld [vmem:[%s1 + $0x138] sm:$0xff]
  %v90 = vld [vmem:[%s1 + $0x140] sm:$0xff]
  %v91 = vld [vmem:[%s1 + $0x148] sm:$0xff]
  %v92 = vld [vmem:[%s1 + $0x150] sm:$0xff]
  %v93 = vld [vmem:[%s1 + $0x158] sm:$0xff]
  %v94 = vld [vmem:[%s1 + $0x160] sm:$0xff]
  %v95 = vld [vmem:[%s1 + $0x168] sm:$0xff]
  %v96 = vld [vmem:[%s1 + $0x170] sm:$0xff]
  %v97 = vld [vmem:[%s1 + $0x178] sm:$0xff]
  %v98 = vld [vmem:[%s1 + $0x180] sm:$0xff]
  %v99 = vld [vmem:[%s1 + $0x188] sm:$0xff]
  %v100 = vld [vmem:[%s1 + $0x190] sm:$0xff]
  %v101 = vld [vmem:[%s1 + $0x198] sm:$0xff]
  %v102 = vld [vmem:[%s1 + $0x1a0] sm:$0xff]
  %v103 = vld [vmem:[%s1 + $0x1a8] sm:$0xff]
  %v104 = vld [vmem:[%s1 + $0x1b0] sm:$0xff]
  %v105 = vld [vmem:[%s1 + $0x1b8] sm:$0xff]
  %v106 = vld [vmem:[%s1 + $0x1c0] sm:$0xff]
  %v107 = vld [vmem:[%s1 + $0x1c8] sm:$0xff]
  %v108 = vld [vmem:[%s1 + $0x1d0] sm:$0xff]
  %v109 = vld [vmem:[%s1 + $0x1d8] sm:$0xff]
  %v110 = vld [vmem:[%s1 + $0x1e0] sm:$0xff]
  %v111 = vld [vmem:[%s1 + $0x1e8] sm:$0xff]
  %v112 = vld [vmem:[%s1 + $0x1f0] sm:$0xff]
  %v113 = vld [vmem:[%s1 + $0x1f8] sm:$0xff]
  %v114 = vld [vmem:[%s1 + $0x200] sm:$0xff]
  %v115 = vld [vmem:[%s1 + $0x208] sm:$0xff]
  %v116 = vld [vmem:[%s1 + $0x210] sm:$0xff]
  %v117 = vld [vmem:[%s1 + $0x218] sm:$0xff]
  %v118 = vld [vmem:[%s1 + $0x220] sm:$0xff]
  %v119 = vld [vmem:[%s1 + $0x228] sm:$0xff]
  %v120 = vld [vmem:[%s1 + $0x230] sm:$0xff]
  %v121 = vld [vmem:[%s1 + $0x238] sm:$0xff]
  %v122 = vld [vmem:[%s1 + $0x240] sm:$0xff]
  %v123 = vld [vmem:[%s1 + $0x248] sm:$0xff]
  %v124 = vld [vmem:[%s1 + $0x250] sm:$0xff]
  %v125 = vld [vmem:[%s1 + $0x258] sm:$0xff]
  %v126 = vld [vmem:[%s1 + $0x260] sm:$0xff]
  %v127 = vld [vmem:[%s1 + $0x268] sm:$0xff]
  %v128 = vld [vmem:[%s1 + $0x270] sm:$0xff]
  %v129 = vld [vmem:[%s1 + $0x278] sm:$0xff]
  %v130 = vld [vmem:[%s1 + $0x280] sm:$0xff]
  %v131 = vld [vmem:[%s1 + $0x288] sm:$0xff]
  %v132 = vld [vmem:[%s1 + $0x290] sm:$0xff]
  %v133 = vld [vmem:[%s1 + $0x298] sm:$0xff]
  %v134 = vld [vmem:[%s1 + $0x2a0] sm:$0xff]
  %v135 = vld [vmem:[%s1 + $0x2a8] sm:$0xff]
  %v136 = vld [vmem:[%s1 + $0x2b0] sm:$0xff]
  %v137 = vld [vmem:[%s1 + $0x2b8] sm:$0xff]
  %v138 = vld [vmem:[%s1 + $0x2c0] sm:$0xff]
  %v139 = vld [vmem:[%s1 + $0x2c8] sm:$0xff]
  %v140 = vld [vmem:[%s1 + $0x2d0] sm:$0xff]
  %v141 = vld [vmem:[%s1 + $0x2d8] sm:$0xff]
  %v142 = vld [vmem:[%s1 + $0x2e0] sm:$0xff]
  %v143 = vld [vmem:[%s1 + $0x2e8] sm:$0xff]
  %v144 = vld [vmem:[%s1 + $0x2f0] sm:$0xff]
  %v145 = vld [vmem:[%s1 + $0x2f8] sm:$0xff]
  %v146 = vld [vmem:[%s2] sm:$0x3]
  %v148 = vperm.slane %v146, 0
  %v149 = vperm.slane %v146, 1
  %v155 = vunpack.c.l.b16 %v47
  %v156 = vunpack.c.h.b16 %v47
  %v157 = vunpack.c.l.b16 %v48
  %v158 = vunpack.c.h.b16 %v48
  %v159 = vunpack.c.l.b16 %v49
  %v160 = vunpack.c.h.b16 %v49
  %v161 = vpack.c.b16 %v155, %v155
  %v162 = vpack.c.b16 %v156, %v156
  %v163 = vpack.c.b16 %v157, %v157
  %v164 = vpack.c.b16 %v158, %v158
  %v165 = vpack.c.b16 %v159, %v159
  %v166 = vpack.c.b16 %v160, %v160
  %v269 = vunpack.c.l.b16 %v50
  %v270 = vunpack.c.h.b16 %v50
  %v271 = vunpack.c.l.b16 %v51
  %v272 = vunpack.c.h.b16 %v51
  %v273 = vunpack.c.l.b16 %v52
  %v274 = vunpack.c.h.b16 %v52
  %v275 = vunpack.c.l.b16 %v53
  %v276 = vunpack.c.h.b16 %v53
  %v277 = vunpack.c.l.b16 %v54
  %v278 = vunpack.c.h.b16 %v54
  %v279 = vunpack.c.l.b16 %v55
  %v280 = vunpack.c.h.b16 %v55
  %v281 = vunpack.c.l.b16 %v56
  %v282 = vunpack.c.h.b16 %v56
  %v283 = vunpack.c.l.b16 %v57
  %v284 = vunpack.c.h.b16 %v57
  %v285 = vunpack.c.l.b16 %v58
  %v286 = vunpack.c.h.b16 %v58
  %v287 = vunpack.c.l.b16 %v59
  %v288 = vunpack.c.h.b16 %v59
  %v289 = vunpack.c.l.b16 %v60
  %v290 = vunpack.c.h.b16 %v60
  %v291 = vunpack.c.l.b16 %v61
  %v292 = vunpack.c.h.b16 %v61
  %v293 = vunpack.c.l.b16 %v62
  %v294 = vunpack.c.h.b16 %v62
  %v295 = vunpack.c.l.b16 %v63
  %v296 = vunpack.c.h.b16 %v63
  %v297 = vunpack.c.l.b16 %v64
  %v298 = vunpack.c.h.b16 %v64
  %v299 = vunpack.c.l.b16 %v65
  %v300 = vunpack.c.h.b16 %v65
  %v301 = vunpack.c.l.b16 %v66
  %v302 = vunpack.c.h.b16 %v66
  %v303 = vunpack.c.l.b16 %v67
  %v304 = vunpack.c.h.b16 %v67
  %v305 = vunpack.c.l.b16 %v68
  %v306 = vunpack.c.h.b16 %v68
  %v307 = vunpack.c.l.b16 %v69
  %v308 = vunpack.c.h.b16 %v69
  %v309 = vunpack.c.l.b16 %v70
  %v310 = vunpack.c.h.b16 %v70
  %v311 = vunpack.c.l.b16 %v71
  %v312 = vunpack.c.h.b16 %v71
  %v313 = vunpack.c.l.b16 %v72
  %v314 = vunpack.c.h.b16 %v72
  %v315 = vunpack.c.l.b16 %v73
  %v316 = vunpack.c.h.b16 %v73
  %v317 = vunpack.c.l.b16 %v74
  %v318 = vunpack.c.h.b16 %v74
  %v319 = vunpack.c.l.b16 %v75
  %v320 = vunpack.c.h.b16 %v75
  %v321 = vunpack.c.l.b16 %v76
  %v322 = vunpack.c.h.b16 %v76
  %v323 = vunpack.c.l.b16 %v77
  %v324 = vunpack.c.h.b16 %v77
  %v325 = vunpack.c.l.b16 %v78
  %v326 = vunpack.c.h.b16 %v78
  %v327 = vunpack.c.l.b16 %v79
  %v328 = vunpack.c.h.b16 %v79
  %v329 = vunpack.c.l.b16 %v80
  %v330 = vunpack.c.h.b16 %v80
  %v331 = vunpack.c.l.b16 %v81
  %v332 = vunpack.c.h.b16 %v81
  %v333 = vunpack.c.l.b16 %v82
  %v334 = vunpack.c.h.b16 %v82
  %v335 = vunpack.c.l.b16 %v83
  %v336 = vunpack.c.h.b16 %v83
  %v337 = vunpack.c.l.b16 %v84
  %v338 = vunpack.c.h.b16 %v84
  %v339 = vunpack.c.l.b16 %v85
  %v340 = vunpack.c.h.b16 %v85
  %v341 = vunpack.c.l.b16 %v86
  %v342 = vunpack.c.h.b16 %v86
  %v343 = vunpack.c.l.b16 %v87
  %v344 = vunpack.c.h.b16 %v87
  %v345 = vunpack.c.l.b16 %v88
  %v346 = vunpack.c.h.b16 %v88
  %v347 = vunpack.c.l.b16 %v89
  %v348 = vunpack.c.h.b16 %v89
  %v349 = vunpack.c.l.b16 %v90
  %v350 = vunpack.c.h.b16 %v90
  %v351 = vunpack.c.l.b16 %v91
  %v352 = vunpack.c.h.b16 %v91
  %v353 = vunpack.c.l.b16 %v92
  %v354 = vunpack.c.h.b16 %v92
  %v355 = vunpack.c.l.b16 %v93
  %v356 = vunpack.c.h.b16 %v93
  %v357 = vunpack.c.l.b16 %v94
  %v358 = vunpack.c.h.b16 %v94
  %v359 = vunpack.c.l.b16 %v95
  %v360 = vunpack.c.h.b16 %v95
  %v361 = vunpack.c.l.b16 %v96
  %v362 = vunpack.c.h.b16 %v96
  %v363 = vunpack.c.l.b16 %v97
  %v364 = vunpack.c.h.b16 %v97
  %v365 = vunpack.c.l.b16 %v98
  %v366 = vunpack.c.h.b16 %v98
  %v367 = vunpack.c.l.b16 %v99
  %v368 = vunpack.c.h.b16 %v99
  %v369 = vunpack.c.l.b16 %v100
  %v370 = vunpack.c.h.b16 %v100
  %v371 = vunpack.c.l.b16 %v101
  %v372 = vunpack.c.h.b16 %v101
  %v373 = vunpack.c.l.b16 %v102
  %v374 = vunpack.c.h.b16 %v102
  %v375 = vunpack.c.l.b16 %v103
  %v376 = vunpack.c.h.b16 %v103
  %v377 = vunpack.c.l.b16 %v104
  %v378 = vunpack.c.h.b16 %v104
  %v379 = vunpack.c.l.b16 %v105
  %v380 = vunpack.c.h.b16 %v105
  %v381 = vunpack.c.l.b16 %v106
  %v382 = vunpack.c.h.b16 %v106
  %v383 = vunpack.c.l.b16 %v107
  %v384 = vunpack.c.h.b16 %v107
  %v385 = vunpack.c.l.b16 %v108
  %v386 = vunpack.c.h.b16 %v108
  %v387 = vunpack.c.l.b16 %v109
  %v388 = vunpack.c.h.b16 %v109
  %v389 = vunpack.c.l.b16 %v110
  %v390 = vunpack.c.h.b16 %v110
  %v391 = vunpack.c.l.b16 %v111
  %v392 = vunpack.c.h.b16 %v111
  %v393 = vunpack.c.l.b16 %v112
  %v394 = vunpack.c.h.b16 %v112
  %v395 = vunpack.c.l.b16 %v113
  %v396 = vunpack.c.h.b16 %v113
  %v397 = vunpack.c.l.b16 %v114
  %v398 = vunpack.c.h.b16 %v114
  %v399 = vunpack.c.l.b16 %v115
  %v400 = vunpack.c.h.b16 %v115
  %v401 = vunpack.c.l.b16 %v116
  %v402 = vunpack.c.h.b16 %v116
  %v403 = vunpack.c.l.b16 %v117
  %v404 = vunpack.c.h.b16 %v117
  %v405 = vunpack.c.l.b16 %v118
  %v406 = vunpack.c.h.b16 %v118
  %v407 = vunpack.c.l.b16 %v119
  %v408 = vunpack.c.h.b16 %v119
  %v409 = vunpack.c.l.b16 %v120
  %v410 = vunpack.c.h.b16 %v120
  %v411 = vunpack.c.l.b16 %v121
  %v412 = vunpack.c.h.b16 %v121
  %v413 = vunpack.c.l.b16 %v122
  %v414 = vunpack.c.h.b16 %v122
  %v415 = vunpack.c.l.b16 %v123
  %v416 = vunpack.c.h.b16 %v123
  %v417 = vunpack.c.l.b16 %v124
  %v418 = vunpack.c.h.b16 %v124
  %v419 = vunpack.c.l.b16 %v125
  %v420 = vunpack.c.h.b16 %v125
  %v421 = vunpack.c.l.b16 %v126
  %v422 = vunpack.c.h.b16 %v126
  %v423 = vunpack.c.l.b16 %v127
  %v424 = vunpack.c.h.b16 %v127
  %v425 = vunpack.c.l.b16 %v128
  %v426 = vunpack.c.h.b16 %v128
  %v427 = vunpack.c.l.b16 %v129
  %v428 = vunpack.c.h.b16 %v129
  %v429 = vunpack.c.l.b16 %v130
  %v430 = vunpack.c.h.b16 %v130
  %v431 = vunpack.c.l.b16 %v131
  %v432 = vunpack.c.h.b16 %v131
  %v433 = vunpack.c.l.b16 %v132
  %v434 = vunpack.c.h.b16 %v132
  %v435 = vunpack.c.l.b16 %v133
  %v436 = vunpack.c.h.b16 %v133
  %v437 = vunpack.c.l.b16 %v134
  %v438 = vunpack.c.h.b16 %v134
  %v439 = vunpack.c.l.b16 %v135
  %v440 = vunpack.c.h.b16 %v135
  %v441 = vunpack.c.l.b16 %v136
  %v442 = vunpack.c.h.b16 %v136
  %v443 = vunpack.c.l.b16 %v137
  %v444 = vunpack.c.h.b16 %v137
  %v445 = vunpack.c.l.b16 %v138
  %v446 = vunpack.c.h.b16 %v138
  %v447 = vunpack.c.l.b16 %v139
  %v448 = vunpack.c.h.b16 %v139
  %v449 = vunpack.c.l.b16 %v140
  %v450 = vunpack.c.h.b16 %v140
  %v451 = vunpack.c.l.b16 %v141
  %v452 = vunpack.c.h.b16 %v141
  %v453 = vunpack.c.l.b16 %v142
  %v454 = vunpack.c.h.b16 %v142
  %v455 = vunpack.c.l.b16 %v143
  %v456 = vunpack.c.h.b16 %v143
  %v457 = vunpack.c.l.b16 %v144
  %v458 = vunpack.c.h.b16 %v144
  %v459 = vunpack.c.l.b16 %v145
  %v460 = vunpack.c.h.b16 %v145
  %v461 = vpack.c.b16 %v271, %v269
  %v462 = vpack.c.b16 %v272, %v270
  %v463 = vpack.c.b16 %v275, %v273
  %v464 = vpack.c.b16 %v276, %v274
  %v465 = vpack.c.b16 %v279, %v277
  %v466 = vpack.c.b16 %v280, %v278
  %v467 = vpack.c.b16 %v283, %v281
  %v468 = vpack.c.b16 %v284, %v282
  %v469 = vpack.c.b16 %v287, %v285
  %v470 = vpack.c.b16 %v288, %v286
  %v471 = vpack.c.b16 %v291, %v289
  %v472 = vpack.c.b16 %v292, %v290
  %v473 = vpack.c.b16 %v295, %v293
  %v474 = vpack.c.b16 %v296, %v294
  %v475 = vpack.c.b16 %v299, %v297
  %v476 = vpack.c.b16 %v300, %v298
  %v477 = vpack.c.b16 %v303, %v301
  %v478 = vpack.c.b16 %v304, %v302
  %v479 = vpack.c.b16 %v307, %v305
  %v480 = vpack.c.b16 %v308, %v306
  %v481 = vpack.c.b16 %v311, %v309
  %v482 = vpack.c.b16 %v312, %v310
  %v483 = vpack.c.b16 %v315, %v313
  %v484 = vpack.c.b16 %v316, %v314
  %v485 = vpack.c.b16 %v319, %v317
  %v486 = vpack.c.b16 %v320, %v318
  %v487 = vpack.c.b16 %v323, %v321
  %v488 = vpack.c.b16 %v324, %v322
  %v489 = vpack.c.b16 %v327, %v325
  %v490 = vpack.c.b16 %v328, %v326
  %v491 = vpack.c.b16 %v331, %v329
  %v492 = vpack.c.b16 %v332, %v330
  %v493 = vpack.c.b16 %v335, %v333
  %v494 = vpack.c.b16 %v336, %v334
  %v495 = vpack.c.b16 %v339, %v337
  %v496 = vpack.c.b16 %v340, %v338
  %v497 = vpack.c.b16 %v343, %v341
  %v498 = vpack.c.b16 %v344, %v342
  %v499 = vpack.c.b16 %v347, %v345
  %v500 = vpack.c.b16 %v348, %v346
  %v501 = vpack.c.b16 %v351, %v349
  %v502 = vpack.c.b16 %v352, %v350
  %v503 = vpack.c.b16 %v355, %v353
  %v504 = vpack.c.b16 %v356, %v354
  %v505 = vpack.c.b16 %v359, %v357
  %v506 = vpack.c.b16 %v360, %v358
  %v507 = vpack.c.b16 %v363, %v361
  %v508 = vpack.c.b16 %v364, %v362
  %v509 = vpack.c.b16 %v367, %v365
  %v510 = vpack.c.b16 %v368, %v366
  %v511 = vpack.c.b16 %v371, %v369
  %v512 = vpack.c.b16 %v372, %v370
  %v513 = vpack.c.b16 %v375, %v373
  %v514 = vpack.c.b16 %v376, %v374
  %v515 = vpack.c.b16 %v379, %v377
  %v516 = vpack.c.b16 %v380, %v378
  %v517 = vpack.c.b16 %v383, %v381
  %v518 = vpack.c.b16 %v384, %v382
  %v519 = vpack.c.b16 %v387, %v385
  %v520 = vpack.c.b16 %v388, %v386
  %v521 = vpack.c.b16 %v391, %v389
  %v522 = vpack.c.b16 %v392, %v390
  %v523 = vpack.c.b16 %v395, %v393
  %v524 = vpack.c.b16 %v396, %v394
  %v525 = vpack.c.b16 %v399, %v397
  %v526 = vpack.c.b16 %v400, %v398
  %v527 = vpack.c.b16 %v403, %v401
  %v528 = vpack.c.b16 %v404, %v402
  %v529 = vpack.c.b16 %v407, %v405
  %v530 = vpack.c.b16 %v408, %v406
  %v531 = vpack.c.b16 %v411, %v409
  %v532 = vpack.c.b16 %v412, %v410
  %v533 = vpack.c.b16 %v415, %v413
  %v534 = vpack.c.b16 %v416, %v414
  %v535 = vpack.c.b16 %v419, %v417
  %v536 = vpack.c.b16 %v420, %v418
  %v537 = vpack.c.b16 %v423, %v421
  %v538 = vpack.c.b16 %v424, %v422
  %v539 = vpack.c.b16 %v427, %v425
  %v540 = vpack.c.b16 %v428, %v426
  %v541 = vpack.c.b16 %v431, %v429
  %v542 = vpack.c.b16 %v432, %v430
  %v543 = vpack.c.b16 %v435, %v433
  %v544 = vpack.c.b16 %v436, %v434
  %v545 = vpack.c.b16 %v439, %v437
  %v546 = vpack.c.b16 %v440, %v438
  %v547 = vpack.c.b16 %v443, %v441
  %v548 = vpack.c.b16 %v444, %v442
  %v549 = vpack.c.b16 %v447, %v445
  %v550 = vpack.c.b16 %v448, %v446
  %v551 = vpack.c.b16 %v451, %v449
  %v552 = vpack.c.b16 %v452, %v450
  %v553 = vpack.c.b16 %v455, %v453
  %v554 = vpack.c.b16 %v456, %v454
  %v555 = vpack.c.b16 %v459, %v457
  %v556 = vpack.c.b16 %v460, %v458
  %653 = vmatpush.bf16.msra.mxu0 %v475
  %654 = vmatpush.bf16.msra.mxu0 %v473
  %655 = vmatpush.bf16.msra.mxu0 %v471
  %656 = vmatpush.bf16.msra.mxu0 %v469
  %657 = vmatpush.bf16.msra.mxu0 %v467
  %658 = vmatpush.bf16.msra.mxu0 %v465
  %659 = vmatpush.bf16.msra.mxu0 %v463
  %660 = vmatpush.bf16.msra.mxu0 %v461
  %661 = vmatmul.bf16.gmra.mxu0 %v161
  %v662 = vpop.f32.mrf.mxu0
  %v663 = vadd.f32 %v148, %v662
  %v664 = vpop.f32.mrf.mxu0
  %665 = vdwg.mxu0
  %666 = vmatpush.bf16.msra.mxu0 %v491
  %667 = vmatpush.bf16.msra.mxu0 %v489
  %668 = vmatpush.bf16.msra.mxu0 %v487
  %669 = vmatpush.bf16.msra.mxu0 %v485
  %670 = vmatpush.bf16.msra.mxu0 %v483
  %671 = vmatpush.bf16.msra.mxu0 %v481
  %672 = vmatpush.bf16.msra.mxu0 %v479
  %673 = vmatpush.bf16.msra.mxu0 %v477
  %674 = vmatmul.bf16.gmra.mxu0 %v162
  %v675 = vpop.f32.mrf.mxu0
  %v676 = vadd.f32 %v663, %v675
  %v677 = vpop.f32.mrf.mxu0
  %678 = vdwg.mxu0
  %679 = vmatpush.bf16.msra.mxu0 %v507
  %680 = vmatpush.bf16.msra.mxu0 %v505
  %681 = vmatpush.bf16.msra.mxu0 %v503
  %682 = vmatpush.bf16.msra.mxu0 %v501
  %683 = vmatpush.bf16.msra.mxu0 %v499
  %684 = vmatpush.bf16.msra.mxu0 %v497
  %685 = vmatpush.bf16.msra.mxu0 %v495
  %686 = vmatpush.bf16.msra.mxu0 %v493
  %687 = vmatmul.bf16.gmra.mxu0 %v163
  %v688 = vpop.f32.mrf.mxu0
  %v689 = vadd.f32 %v676, %v688
  %v690 = vpop.f32.mrf.mxu0
  %691 = vdwg.mxu0
  %692 = vmatpush.bf16.msra.mxu0 %v523
  %693 = vmatpush.bf16.msra.mxu0 %v521
  %694 = vmatpush.bf16.msra.mxu0 %v519
  %695 = vmatpush.bf16.msra.mxu0 %v517
  %696 = vmatpush.bf16.msra.mxu0 %v515
  %697 = vmatpush.bf16.msra.mxu0 %v513
  %698 = vmatpush.bf16.msra.mxu0 %v511
  %699 = vmatpush.bf16.msra.mxu0 %v509
  %700 = vmatmul.bf16.gmra.mxu0 %v164
  %v701 = vpop.f32.mrf.mxu0
  %v702 = vadd.f32 %v689, %v701
  %v703 = vpop.f32.mrf.mxu0
  %704 = vdwg.mxu0
  %705 = vmatpush.bf16.msra.mxu0 %v539
  %706 = vmatpush.bf16.msra.mxu0 %v537
  %707 = vmatpush.bf16.msra.mxu0 %v535
  %708 = vmatpush.bf16.msra.mxu0 %v533
  %709 = vmatpush.bf16.msra.mxu0 %v531
  %710 = vmatpush.bf16.msra.mxu0 %v529
  %711 = vmatpush.bf16.msra.mxu0 %v527
  %712 = vmatpush.bf16.msra.mxu0 %v525
  %713 = vmatmul.bf16.gmra.mxu0 %v165
  %v714 = vpop.f32.mrf.mxu0
  %v715 = vadd.f32 %v702, %v714
  %v716 = vpop.f32.mrf.mxu0
  %717 = vdwg.mxu0
  %718 = vmatpush.bf16.msra.mxu0 %v555
  %719 = vmatpush.bf16.msra.mxu0 %v553
  %720 = vmatpush.bf16.msra.mxu0 %v551
  %721 = vmatpush.bf16.msra.mxu0 %v549
  %722 = vmatpush.bf16.msra.mxu0 %v547
  %723 = vmatpush.bf16.msra.mxu0 %v545
  %724 = vmatpush.bf16.msra.mxu0 %v543
  %725 = vmatpush.bf16.msra.mxu0 %v541
  %726 = vmatmul.bf16.gmra.mxu0 %v166
  %v727 = vpop.f32.mrf.mxu0
  %v728 = vadd.f32 %v715, %v727
  %v729 = vpop.f32.mrf.mxu0
  %730 = vdwg.mxu0
  %731 = vmatpush.bf16.msra.mxu0 %v476
  %732 = vmatpush.bf16.msra.mxu0 %v474
  %733 = vmatpush.bf16.msra.mxu0 %v472
  %734 = vmatpush.bf16.msra.mxu0 %v470
  %735 = vmatpush.bf16.msra.mxu0 %v468
  %736 = vmatpush.bf16.msra.mxu0 %v466
  %737 = vmatpush.bf16.msra.mxu0 %v464
  %738 = vmatpush.bf16.msra.mxu0 %v462
  %739 = vmatmul.bf16.gmra.mxu0 %v161
  %v740 = vpop.f32.mrf.mxu0
  %v741 = vadd.f32 %v149, %v740
  %v742 = vpop.f32.mrf.mxu0
  %743 = vdwg.mxu0
  %744 = vmatpush.bf16.msra.mxu0 %v492
  %745 = vmatpush.bf16.msra.mxu0 %v490
  %746 = vmatpush.bf16.msra.mxu0 %v488
  %747 = vmatpush.bf16.msra.mxu0 %v486
  %748 = vmatpush.bf16.msra.mxu0 %v484
  %749 = vmatpush.bf16.msra.mxu0 %v482
  %750 = vmatpush.bf16.msra.mxu0 %v480
  %751 = vmatpush.bf16.msra.mxu0 %v478
  %752 = vmatmul.bf16.gmra.mxu0 %v162
  %v753 = vpop.f32.mrf.mxu0
  %v754 = vadd.f32 %v741, %v753
  %v755 = vpop.f32.mrf.mxu0
  %756 = vdwg.mxu0
  %757 = vmatpush.bf16.msra.mxu0 %v508
  %758 = vmatpush.bf16.msra.mxu0 %v506
  %759 = vmatpush.bf16.msra.mxu0 %v504
  %760 = vmatpush.bf16.msra.mxu0 %v502
  %761 = vmatpush.bf16.msra.mxu0 %v500
  %762 = vmatpush.bf16.msra.mxu0 %v498
  %763 = vmatpush.bf16.msra.mxu0 %v496
  %764 = vmatpush.bf16.msra.mxu0 %v494
  %765 = vmatmul.bf16.gmra.mxu0 %v163
  %v766 = vpop.f32.mrf.mxu0
  %v767 = vadd.f32 %v754, %v766
  %v768 = vpop.f32.mrf.mxu0
  %769 = vdwg.mxu0
  %770 = vmatpush.bf16.msra.mxu0 %v524
  %771 = vmatpush.bf16.msra.mxu0 %v522
  %772 = vmatpush.bf16.msra.mxu0 %v520
  %773 = vmatpush.bf16.msra.mxu0 %v518
  %774 = vmatpush.bf16.msra.mxu0 %v516
  %775 = vmatpush.bf16.msra.mxu0 %v514
  %776 = vmatpush.bf16.msra.mxu0 %v512
  %777 = vmatpush.bf16.msra.mxu0 %v510
  %778 = vmatmul.bf16.gmra.mxu0 %v164
  %v779 = vpop.f32.mrf.mxu0
  %v780 = vadd.f32 %v767, %v779
  %v781 = vpop.f32.mrf.mxu0
  %782 = vdwg.mxu0
  %783 = vmatpush.bf16.msra.mxu0 %v540
  %784 = vmatpush.bf16.msra.mxu0 %v538
  %785 = vmatpush.bf16.msra.mxu0 %v536
  %786 = vmatpush.bf16.msra.mxu0 %v534
  %787 = vmatpush.bf16.msra.mxu0 %v532
  %788 = vmatpush.bf16.msra.mxu0 %v530
  %789 = vmatpush.bf16.msra.mxu0 %v528
  %790 = vmatpush.bf16.msra.mxu0 %v526
  %791 = vmatmul.bf16.gmra.mxu0 %v165
  %v792 = vpop.f32.mrf.mxu0
  %v793 = vadd.f32 %v780, %v792
  %v794 = vpop.f32.mrf.mxu0
  %795 = vdwg.mxu0
  %796 = vmatpush.bf16.msra.mxu0 %v556
  %797 = vmatpush.bf16.msra.mxu0 %v554
  %798 = vmatpush.bf16.msra.mxu0 %v552
  %799 = vmatpush.bf16.msra.mxu0 %v550
  %800 = vmatpush.bf16.msra.mxu0 %v548
  %801 = vmatpush.bf16.msra.mxu0 %v546
  %802 = vmatpush.bf16.msra.mxu0 %v544
  %803 = vmatpush.bf16.msra.mxu0 %v542
  %804 = vmatmul.bf16.gmra.mxu0 %v166
  %v805 = vpop.f32.mrf.mxu0
  %v806 = vadd.f32 %v793, %v805
  %v807 = vpop.f32.mrf.mxu0
  %808 = vdwg.mxu0
  %v809 = vmax.f32 %v728, 0.0
  %v810 = vmax.f32 %v806, 0.0
  %v811 = vpack.c.bf16 %v809, %v809
  %v812 = vpack.c.bf16 %v810, %v810
  %v813 = vld [vmem:[%s3] sm:$0xf]
  %v814 = vld [vmem:[%s3 + $0x4] sm:$0xf]
  %v815 = vld [vmem:[%s3 + $0x8] sm:$0xf]
  %v816 = vld [vmem:[%s3 + $0xc] sm:$0xf]
  %v817 = vld [vmem:[%s3 + $0x10] sm:$0xf]
  %v818 = vld [vmem:[%s3 + $0x14] sm:$0xf]
  %v819 = vld [vmem:[%s3 + $0x18] sm:$0xf]
  %v820 = vld [vmem:[%s3 + $0x1c] sm:$0xf]
  %v821 = vld [vmem:[%s3 + $0x20] sm:$0xf]
  %v822 = vld [vmem:[%s3 + $0x24] sm:$0xf]
  %v823 = vld [vmem:[%s3 + $0x28] sm:$0xf]
  %v824 = vld [vmem:[%s3 + $0x2c] sm:$0xf]
  %v825 = vld [vmem:[%s3 + $0x30] sm:$0xf]
  %v826 = vld [vmem:[%s3 + $0x34] sm:$0xf]
  %v827 = vld [vmem:[%s3 + $0x38] sm:$0xf]
  %v828 = vld [vmem:[%s3 + $0x3c] sm:$0xf]
  %v829 = vld [vmem:[%s3 + $0x40] sm:$0xf]
  %v830 = vld [vmem:[%s3 + $0x44] sm:$0xf]
  %v831 = vld [vmem:[%s3 + $0x48] sm:$0xf]
  %v832 = vld [vmem:[%s3 + $0x4c] sm:$0xf]
  %v833 = vld [vmem:[%s3 + $0x50] sm:$0xf]
  %v834 = vld [vmem:[%s3 + $0x54] sm:$0xf]
  %v835 = vld [vmem:[%s3 + $0x58] sm:$0xf]
  %v836 = vld [vmem:[%s3 + $0x5c] sm:$0xf]
  %v837 = vld [vmem:[%s3 + $0x60] sm:$0xf]
  %v838 = vld [vmem:[%s3 + $0x64] sm:$0xf]
  %v839 = vld [vmem:[%s3 + $0x68] sm:$0xf]
  %v840 = vld [vmem:[%s3 + $0x6c] sm:$0xf]
  %v841 = vld [vmem:[%s3 + $0x70] sm:$0xf]
  %v842 = vld [vmem:[%s3 + $0x74] sm:$0xf]
  %v843 = vld [vmem:[%s3 + $0x78] sm:$0xf]
  %v844 = vld [vmem:[%s3 + $0x7c] sm:$0xf]
  %v845 = vld [vmem:[%s4] sm:$0x1]
  %v847 = vperm.slane %v845, 0
  %v881 = vunpack.c.l.b16 %v813
  %v882 = vunpack.c.l.b16 %v814
  %v883 = vunpack.c.l.b16 %v815
  %v884 = vunpack.c.l.b16 %v816
  %v885 = vunpack.c.l.b16 %v817
  %v886 = vunpack.c.l.b16 %v818
  %v887 = vunpack.c.l.b16 %v819
  %v888 = vunpack.c.l.b16 %v820
  %v889 = vunpack.c.l.b16 %v821
  %v890 = vunpack.c.l.b16 %v822
  %v891 = vunpack.c.l.b16 %v823
  %v892 = vunpack.c.l.b16 %v824
  %v893 = vunpack.c.l.b16 %v825
  %v894 = vunpack.c.l.b16 %v826
  %v895 = vunpack.c.l.b16 %v827
  %v896 = vunpack.c.l.b16 %v828
  %v897 = vunpack.c.l.b16 %v829
  %v898 = vunpack.c.l.b16 %v830
  %v899 = vunpack.c.l.b16 %v831
  %v900 = vunpack.c.l.b16 %v832
  %v901 = vunpack.c.l.b16 %v833
  %v902 = vunpack.c.l.b16 %v834
  %v903 = vunpack.c.l.b16 %v835
  %v904 = vunpack.c.l.b16 %v836
  %v905 = vunpack.c.l.b16 %v837
  %v906 = vunpack.c.l.b16 %v838
  %v907 = vunpack.c.l.b16 %v839
  %v908 = vunpack.c.l.b16 %v840
  %v909 = vunpack.c.l.b16 %v841
  %v910 = vunpack.c.l.b16 %v842
  %v911 = vunpack.c.l.b16 %v843
  %v912 = vunpack.c.l.b16 %v844
  %v913 = vpack.c.b16 %v882, %v881
  %v914 = vpack.c.b16 %v884, %v883
  %v915 = vpack.c.b16 %v886, %v885
  %v916 = vpack.c.b16 %v888, %v887
  %v917 = vpack.c.b16 %v890, %v889
  %v918 = vpack.c.b16 %v892, %v891
  %v919 = vpack.c.b16 %v894, %v893
  %v920 = vpack.c.b16 %v896, %v895
  %v921 = vpack.c.b16 %v898, %v897
  %v922 = vpack.c.b16 %v900, %v899
  %v923 = vpack.c.b16 %v902, %v901
  %v924 = vpack.c.b16 %v904, %v903
  %v925 = vpack.c.b16 %v906, %v905
  %v926 = vpack.c.b16 %v908, %v907
  %v927 = vpack.c.b16 %v910, %v909
  %v928 = vpack.c.b16 %v912, %v911
  %945 = vmatpush.bf16.msra.mxu0 %v920
  %946 = vmatpush.bf16.msra.mxu0 %v919
  %947 = vmatpush.bf16.msra.mxu0 %v918
  %948 = vmatpush.bf16.msra.mxu0 %v917
  %949 = vmatpush.bf16.msra.mxu0 %v916
  %950 = vmatpush.bf16.msra.mxu0 %v915
  %951 = vmatpush.bf16.msra.mxu0 %v914
  %952 = vmatpush.bf16.msra.mxu0 %v913
  %953 = vmatmul.bf16.gmra.mxu0 %v811
  %v954 = vpop.f32.mrf.mxu0
  %v955 = vadd.f32 %v847, %v954
  %v956 = vpop.f32.mrf.mxu0
  %957 = vdwg.mxu0
  %958 = vmatpush.bf16.msra.mxu0 %v928
  %959 = vmatpush.bf16.msra.mxu0 %v927
  %960 = vmatpush.bf16.msra.mxu0 %v926
  %961 = vmatpush.bf16.msra.mxu0 %v925
  %962 = vmatpush.bf16.msra.mxu0 %v924
  %963 = vmatpush.bf16.msra.mxu0 %v923
  %964 = vmatpush.bf16.msra.mxu0 %v922
  %965 = vmatpush.bf16.msra.mxu0 %v921
  %966 = vmatmul.bf16.gmra.mxu0 %v812
  %v967 = vpop.f32.mrf.mxu0
  %v968 = vadd.f32 %v955, %v967
  %v969 = vpop.f32.mrf.mxu0
  %970 = vdwg.mxu0
  %v971 = vmax.f32 %v968, 0.0
  %v972 = vpack.c.bf16 %v971, %v971
  %v973 = vld [vmem:[%s5] sm:$0xf]
  %v974 = vld [vmem:[%s5 + $0x4] sm:$0xf]
  %v975 = vld [vmem:[%s5 + $0x8] sm:$0xf]
  %v976 = vld [vmem:[%s5 + $0xc] sm:$0xf]
  %v977 = vld [vmem:[%s5 + $0x10] sm:$0xf]
  %v978 = vld [vmem:[%s5 + $0x14] sm:$0xf]
  %v979 = vld [vmem:[%s5 + $0x18] sm:$0xf]
  %v980 = vld [vmem:[%s5 + $0x1c] sm:$0xf]
  %v981 = vld [vmem:[%s6] sm:$0x1]
  %v983 = vperm.slane %v981, 0
  %v993 = vunpack.c.l.b16 %v973
  %v994 = vunpack.c.l.b16 %v974
  %v995 = vunpack.c.l.b16 %v975
  %v996 = vunpack.c.l.b16 %v976
  %v997 = vunpack.c.l.b16 %v977
  %v998 = vunpack.c.l.b16 %v978
  %v999 = vunpack.c.l.b16 %v979
  %v1000 = vunpack.c.l.b16 %v980
  %v1001 = vpack.c.b16 %v994, %v993
  %v1002 = vpack.c.b16 %v996, %v995
  %v1003 = vpack.c.b16 %v998, %v997
  %v1004 = vpack.c.b16 %v1000, %v999
  %vm1009 = vcmask 523264
  %v1011 = vsel %vm1009, %v972, 0
  %1013 = vmatpush.bf16.msra.mxu0 0
  %1014 = vmatpush.bf16.msra.mxu0 0
  %1015 = vmatpush.bf16.msra.mxu0 0
  %1016 = vmatpush.bf16.msra.mxu0 0
  %1017 = vmatpush.bf16.msra.mxu0 %v1004
  %1018 = vmatpush.bf16.msra.mxu0 %v1003
  %1019 = vmatpush.bf16.msra.mxu0 %v1002
  %1020 = vmatpush.bf16.msra.mxu0 %v1001
  %1021 = vmatmul.bf16.gmra.mxu0 %v1011
  %v1022 = vpop.f32.mrf.mxu0
  %v1023 = vadd.f32 %v983, %v1022
  %v1024 = vpop.f32.mrf.mxu0
  %1025 = vdwg.mxu0
  %v1026 = vmax.f32 %v1023, 0.0
  %v1027 = vmul.f32 %v1026, %v1026
  %v1028 = vlaneseq
  %v1029 = vand.u32 %v1028, 127
  %vm1030 = vcmp.lt.s32.totalorder %v1029, 10
  %v1031 = vadd.f32 %v1027, 1e-08
  %v1032 = vlog2.pop %v1031
  %v1033 = vmul.f32 %v1032, 0.6931472
  %v1034 = vsub.f32 %v1027, %v1033
  %v1035 = vsub.f32 %v1034, 1.0
  %v1036 = vsel %vm1030, %v1027, %v1035
  %vm1037 = vcmask 162816
  %v1038 = vsel %vm1037, %v1036, 0.0
  %1039 = vadd.xlane.f32.xlu0 %v1038
  %v1040 = vpop.xlane.xlu0 %1039
  %s1041 = smul.u32 0, 8
  %v1042 = vlaneseq
  %v1043 = vshrl.u32 %v1042, 7
  %v1044 = vstv %s1041
  %v1045 = vadd.s32 %v1044, %v1043
  %vm1046 = vcmp.lt.s32.totalorder %v1045, 4
  %v1047 = vsel %vm1046, %v1040, 0.0
  %vm1048 = vcmask 7168
  %1049 = vst.msk [vmem:[%s14] sm:$0xff] %vm1048, %v1047
  %v1050 = vpack.c.bf16 %v1026, %v1026
  %v1051 = vld [vmem:[%s7] sm:$0xf]
  %v1052 = vld [vmem:[%s7 + $0x4] sm:$0xf]
  %v1053 = vld [vmem:[%s7 + $0x8] sm:$0x3]
  %v1054 = vld [vmem:[%s8] sm:$0x1]
  %v1056 = vperm.slane %v1054, 0
  %v1061 = vunpack.c.l.b16 %v1051
  %v1062 = vunpack.c.l.b16 %v1052
  %v1063 = vunpack.c.l.b16 %v1053
  %v1064 = vpack.c.b16 %v1062, %v1061
  %v1065 = vpack.c.b16 %v1063, %v1063
  %v1068 = vsel %vm1037, %v1050, 0
  %vm1070 = vcmask 1041408
  %v1072 = vsel %vm1070, %v1065, 0
  %1074 = vmatpush.bf16.msra.mxu0 0
  %1075 = vmatpush.bf16.msra.mxu0 0
  %1076 = vmatpush.bf16.msra.mxu0 0
  %1077 = vmatpush.bf16.msra.mxu0 0
  %1078 = vmatpush.bf16.msra.mxu0 0
  %1079 = vmatpush.bf16.msra.mxu0 0
  %1080 = vmatpush.bf16.msra.mxu0 %v1072
  %1081 = vmatpush.bf16.msra.mxu0 %v1064
  %1082 = vmatmul.bf16.gmra.mxu0 %v1068
  %v1083 = vpop.f32.mrf.mxu0
  %v1084 = vadd.f32 %v1056, %v1083
  %v1085 = vpop.f32.mrf.mxu0
  %1086 = vdwg.mxu0
  %v1087 = vmax.f32 %v1084, 0.0
  %v1088 = vpack.c.bf16 %v1087, %v1087
  %v1089 = vld [vmem:[%s9] sm:$0xff]
  %v1090 = vld [vmem:[%s9 + $0x8] sm:$0xff]
  %v1091 = vld [vmem:[%s9 + $0x10] sm:$0xff]
  %v1092 = vld [vmem:[%s9 + $0x18] sm:$0xff]
  %v1093 = vld [vmem:[%s9 + $0x20] sm:$0xff]
  %v1094 = vld [vmem:[%s9 + $0x28] sm:$0xff]
  %v1095 = vld [vmem:[%s9 + $0x30] sm:$0xff]
  %v1096 = vld [vmem:[%s9 + $0x38] sm:$0xff]
  %v1097 = vld [vmem:[%s10] sm:$0x3]
  %v1099 = vperm.slane %v1097, 0
  %v1100 = vperm.slane %v1097, 1
  %v1111 = vunpack.c.l.b16 %v1089
  %v1112 = vunpack.c.h.b16 %v1089
  %v1113 = vunpack.c.l.b16 %v1090
  %v1114 = vunpack.c.h.b16 %v1090
  %v1115 = vunpack.c.l.b16 %v1091
  %v1116 = vunpack.c.h.b16 %v1091
  %v1117 = vunpack.c.l.b16 %v1092
  %v1118 = vunpack.c.h.b16 %v1092
  %v1119 = vunpack.c.l.b16 %v1093
  %v1120 = vunpack.c.h.b16 %v1093
  %v1121 = vunpack.c.l.b16 %v1094
  %v1122 = vunpack.c.h.b16 %v1094
  %v1123 = vunpack.c.l.b16 %v1095
  %v1124 = vunpack.c.h.b16 %v1095
  %v1125 = vunpack.c.l.b16 %v1096
  %v1126 = vunpack.c.h.b16 %v1096
  %v1127 = vpack.c.b16 %v1113, %v1111
  %v1128 = vpack.c.b16 %v1114, %v1112
  %v1129 = vpack.c.b16 %v1117, %v1115
  %v1130 = vpack.c.b16 %v1118, %v1116
  %v1131 = vpack.c.b16 %v1121, %v1119
  %v1132 = vpack.c.b16 %v1122, %v1120
  %v1133 = vpack.c.b16 %v1125, %v1123
  %v1134 = vpack.c.b16 %v1126, %v1124
  %v1144 = vsel %vm1009, %v1088, 0
  %1146 = vmatpush.bf16.msra.mxu0 0
  %1147 = vmatpush.bf16.msra.mxu0 0
  %1148 = vmatpush.bf16.msra.mxu0 0
  %1149 = vmatpush.bf16.msra.mxu0 0
  %1150 = vmatpush.bf16.msra.mxu0 %v1133
  %1151 = vmatpush.bf16.msra.mxu0 %v1131
  %1152 = vmatpush.bf16.msra.mxu0 %v1129
  %1153 = vmatpush.bf16.msra.mxu0 %v1127
  %1154 = vmatmul.bf16.gmra.mxu0 %v1144
  %v1155 = vpop.f32.mrf.mxu0
  %v1156 = vadd.f32 %v1099, %v1155
  %v1157 = vpop.f32.mrf.mxu0
  %1158 = vdwg.mxu0
  %1159 = vmatpush.bf16.msra.mxu0 0
  %1160 = vmatpush.bf16.msra.mxu0 0
  %1161 = vmatpush.bf16.msra.mxu0 0
  %1162 = vmatpush.bf16.msra.mxu0 0
  %1163 = vmatpush.bf16.msra.mxu0 %v1134
  %1164 = vmatpush.bf16.msra.mxu0 %v1132
  %1165 = vmatpush.bf16.msra.mxu0 %v1130
  %1166 = vmatpush.bf16.msra.mxu0 %v1128
  %1167 = vmatmul.bf16.gmra.mxu0 %v1144
  %v1168 = vpop.f32.mrf.mxu0
  %v1169 = vadd.f32 %v1100, %v1168
  %v1170 = vpop.f32.mrf.mxu0
  %1171 = vdwg.mxu0
  %v1172 = vmax.f32 %v1156, 0.0
  %v1173 = vmax.f32 %v1169, 0.0
  %v1174 = vpack.c.bf16 %v1172, %v1172
  %v1175 = vpack.c.bf16 %v1173, %v1173
  %v1176 = vld [vmem:[%s11] sm:$0xff]
  %v1177 = vld [vmem:[%s11 + $0x8] sm:$0xff]
  %v1178 = vld [vmem:[%s11 + $0x10] sm:$0xff]
  %v1179 = vld [vmem:[%s11 + $0x18] sm:$0xff]
  %v1180 = vld [vmem:[%s11 + $0x20] sm:$0xff]
  %v1181 = vld [vmem:[%s11 + $0x28] sm:$0xff]
  %v1182 = vld [vmem:[%s11 + $0x30] sm:$0xff]
  %v1183 = vld [vmem:[%s11 + $0x38] sm:$0xff]
  %v1184 = vld [vmem:[%s11 + $0x40] sm:$0xff]
  %v1185 = vld [vmem:[%s11 + $0x48] sm:$0xff]
  %v1186 = vld [vmem:[%s11 + $0x50] sm:$0xff]
  %v1187 = vld [vmem:[%s11 + $0x58] sm:$0xff]
  %v1188 = vld [vmem:[%s11 + $0x60] sm:$0xff]
  %v1189 = vld [vmem:[%s11 + $0x68] sm:$0xff]
  %v1190 = vld [vmem:[%s11 + $0x70] sm:$0xff]
  %v1191 = vld [vmem:[%s11 + $0x78] sm:$0xff]
  %v1192 = vld [vmem:[%s11 + $0x80] sm:$0xff]
  %v1193 = vld [vmem:[%s11 + $0x88] sm:$0xff]
  %v1194 = vld [vmem:[%s11 + $0x90] sm:$0xff]
  %v1195 = vld [vmem:[%s11 + $0x98] sm:$0xff]
  %v1196 = vld [vmem:[%s11 + $0xa0] sm:$0xff]
  %v1197 = vld [vmem:[%s11 + $0xa8] sm:$0xff]
  %v1198 = vld [vmem:[%s11 + $0xb0] sm:$0xff]
  %v1199 = vld [vmem:[%s11 + $0xb8] sm:$0xff]
  %v1200 = vld [vmem:[%s11 + $0xc0] sm:$0xff]
  %v1201 = vld [vmem:[%s11 + $0xc8] sm:$0xff]
  %v1202 = vld [vmem:[%s11 + $0xd0] sm:$0xff]
  %v1203 = vld [vmem:[%s11 + $0xd8] sm:$0xff]
  %v1204 = vld [vmem:[%s11 + $0xe0] sm:$0xff]
  %v1205 = vld [vmem:[%s11 + $0xe8] sm:$0xff]
  %v1206 = vld [vmem:[%s11 + $0xf0] sm:$0xff]
  %v1207 = vld [vmem:[%s11 + $0xf8] sm:$0xff]
  %v1208 = vld [vmem:[%s11 + $0x100] sm:$0xff]
  %v1209 = vld [vmem:[%s11 + $0x108] sm:$0xff]
  %v1210 = vld [vmem:[%s11 + $0x110] sm:$0xff]
  %v1211 = vld [vmem:[%s11 + $0x118] sm:$0xff]
  %v1212 = vld [vmem:[%s11 + $0x120] sm:$0xff]
  %v1213 = vld [vmem:[%s11 + $0x128] sm:$0xff]
  %v1214 = vld [vmem:[%s11 + $0x130] sm:$0xff]
  %v1215 = vld [vmem:[%s11 + $0x138] sm:$0xff]
  %v1216 = vld [vmem:[%s11 + $0x140] sm:$0xff]
  %v1217 = vld [vmem:[%s11 + $0x148] sm:$0xff]
  %v1218 = vld [vmem:[%s11 + $0x150] sm:$0xff]
  %v1219 = vld [vmem:[%s11 + $0x158] sm:$0xff]
  %v1220 = vld [vmem:[%s11 + $0x160] sm:$0xff]
  %v1221 = vld [vmem:[%s11 + $0x168] sm:$0xff]
  %v1222 = vld [vmem:[%s11 + $0x170] sm:$0xff]
  %v1223 = vld [vmem:[%s11 + $0x178] sm:$0xff]
  %v1224 = vld [vmem:[%s11 + $0x180] sm:$0xff]
  %v1225 = vld [vmem:[%s11 + $0x188] sm:$0xff]
  %v1226 = vld [vmem:[%s11 + $0x190] sm:$0xff]
  %v1227 = vld [vmem:[%s11 + $0x198] sm:$0xff]
  %v1228 = vld [vmem:[%s11 + $0x1a0] sm:$0xff]
  %v1229 = vld [vmem:[%s11 + $0x1a8] sm:$0xff]
  %v1230 = vld [vmem:[%s11 + $0x1b0] sm:$0xff]
  %v1231 = vld [vmem:[%s11 + $0x1b8] sm:$0xff]
  %v1232 = vld [vmem:[%s11 + $0x1c0] sm:$0xff]
  %v1233 = vld [vmem:[%s11 + $0x1c8] sm:$0xff]
  %v1234 = vld [vmem:[%s11 + $0x1d0] sm:$0xff]
  %v1235 = vld [vmem:[%s11 + $0x1d8] sm:$0xff]
  %v1236 = vld [vmem:[%s11 + $0x1e0] sm:$0xff]
  %v1237 = vld [vmem:[%s11 + $0x1e8] sm:$0xff]
  %v1238 = vld [vmem:[%s11 + $0x1f0] sm:$0xff]
  %v1239 = vld [vmem:[%s11 + $0x1f8] sm:$0xff]
  %v1240 = vld [vmem:[%s11 + $0x200] sm:$0xff]
  %v1241 = vld [vmem:[%s11 + $0x208] sm:$0xff]
  %v1242 = vld [vmem:[%s11 + $0x210] sm:$0xff]
  %v1243 = vld [vmem:[%s11 + $0x218] sm:$0xff]
  %v1244 = vld [vmem:[%s11 + $0x220] sm:$0xff]
  %v1245 = vld [vmem:[%s11 + $0x228] sm:$0xff]
  %v1246 = vld [vmem:[%s11 + $0x230] sm:$0xff]
  %v1247 = vld [vmem:[%s11 + $0x238] sm:$0xff]
  %v1248 = vld [vmem:[%s11 + $0x240] sm:$0xff]
  %v1249 = vld [vmem:[%s11 + $0x248] sm:$0xff]
  %v1250 = vld [vmem:[%s11 + $0x250] sm:$0xff]
  %v1251 = vld [vmem:[%s11 + $0x258] sm:$0xff]
  %v1252 = vld [vmem:[%s11 + $0x260] sm:$0xff]
  %v1253 = vld [vmem:[%s11 + $0x268] sm:$0xff]
  %v1254 = vld [vmem:[%s11 + $0x270] sm:$0xff]
  %v1255 = vld [vmem:[%s11 + $0x278] sm:$0xff]
  %v1256 = vld [vmem:[%s11 + $0x280] sm:$0xff]
  %v1257 = vld [vmem:[%s11 + $0x288] sm:$0xff]
  %v1258 = vld [vmem:[%s11 + $0x290] sm:$0xff]
  %v1259 = vld [vmem:[%s11 + $0x298] sm:$0xff]
  %v1260 = vld [vmem:[%s11 + $0x2a0] sm:$0xff]
  %v1261 = vld [vmem:[%s11 + $0x2a8] sm:$0xff]
  %v1262 = vld [vmem:[%s11 + $0x2b0] sm:$0xff]
  %v1263 = vld [vmem:[%s11 + $0x2b8] sm:$0xff]
  %v1264 = vld [vmem:[%s11 + $0x2c0] sm:$0xff]
  %v1265 = vld [vmem:[%s11 + $0x2c8] sm:$0xff]
  %v1266 = vld [vmem:[%s11 + $0x2d0] sm:$0xff]
  %v1267 = vld [vmem:[%s11 + $0x2d8] sm:$0xff]
  %v1268 = vld [vmem:[%s11 + $0x2e0] sm:$0xff]
  %v1269 = vld [vmem:[%s11 + $0x2e8] sm:$0xff]
  %v1270 = vld [vmem:[%s11 + $0x2f0] sm:$0xff]
  %v1271 = vld [vmem:[%s11 + $0x2f8] sm:$0xff]
  %v1272 = vld [vmem:[%s12] sm:$0x3f]
  %v1274 = vperm.slane %v1272, 0
  %v1275 = vperm.slane %v1272, 1
  %v1276 = vperm.slane %v1272, 2
  %v1277 = vperm.slane %v1272, 3
  %v1278 = vperm.slane %v1272, 4
  %v1279 = vperm.slane %v1272, 5
  %v1382 = vunpack.c.l.b16 %v1176
  %v1383 = vunpack.c.h.b16 %v1176
  %v1384 = vunpack.c.l.b16 %v1177
  %v1385 = vunpack.c.h.b16 %v1177
  %v1386 = vunpack.c.l.b16 %v1178
  %v1387 = vunpack.c.h.b16 %v1178
  %v1388 = vunpack.c.l.b16 %v1179
  %v1389 = vunpack.c.h.b16 %v1179
  %v1390 = vunpack.c.l.b16 %v1180
  %v1391 = vunpack.c.h.b16 %v1180
  %v1392 = vunpack.c.l.b16 %v1181
  %v1393 = vunpack.c.h.b16 %v1181
  %v1394 = vunpack.c.l.b16 %v1182
  %v1395 = vunpack.c.h.b16 %v1182
  %v1396 = vunpack.c.l.b16 %v1183
  %v1397 = vunpack.c.h.b16 %v1183
  %v1398 = vunpack.c.l.b16 %v1184
  %v1399 = vunpack.c.h.b16 %v1184
  %v1400 = vunpack.c.l.b16 %v1185
  %v1401 = vunpack.c.h.b16 %v1185
  %v1402 = vunpack.c.l.b16 %v1186
  %v1403 = vunpack.c.h.b16 %v1186
  %v1404 = vunpack.c.l.b16 %v1187
  %v1405 = vunpack.c.h.b16 %v1187
  %v1406 = vunpack.c.l.b16 %v1188
  %v1407 = vunpack.c.h.b16 %v1188
  %v1408 = vunpack.c.l.b16 %v1189
  %v1409 = vunpack.c.h.b16 %v1189
  %v1410 = vunpack.c.l.b16 %v1190
  %v1411 = vunpack.c.h.b16 %v1190
  %v1412 = vunpack.c.l.b16 %v1191
  %v1413 = vunpack.c.h.b16 %v1191
  %v1414 = vunpack.c.l.b16 %v1192
  %v1415 = vunpack.c.h.b16 %v1192
  %v1416 = vunpack.c.l.b16 %v1193
  %v1417 = vunpack.c.h.b16 %v1193
  %v1418 = vunpack.c.l.b16 %v1194
  %v1419 = vunpack.c.h.b16 %v1194
  %v1420 = vunpack.c.l.b16 %v1195
  %v1421 = vunpack.c.h.b16 %v1195
  %v1422 = vunpack.c.l.b16 %v1196
  %v1423 = vunpack.c.h.b16 %v1196
  %v1424 = vunpack.c.l.b16 %v1197
  %v1425 = vunpack.c.h.b16 %v1197
  %v1426 = vunpack.c.l.b16 %v1198
  %v1427 = vunpack.c.h.b16 %v1198
  %v1428 = vunpack.c.l.b16 %v1199
  %v1429 = vunpack.c.h.b16 %v1199
  %v1430 = vunpack.c.l.b16 %v1200
  %v1431 = vunpack.c.h.b16 %v1200
  %v1432 = vunpack.c.l.b16 %v1201
  %v1433 = vunpack.c.h.b16 %v1201
  %v1434 = vunpack.c.l.b16 %v1202
  %v1435 = vunpack.c.h.b16 %v1202
  %v1436 = vunpack.c.l.b16 %v1203
  %v1437 = vunpack.c.h.b16 %v1203
  %v1438 = vunpack.c.l.b16 %v1204
  %v1439 = vunpack.c.h.b16 %v1204
  %v1440 = vunpack.c.l.b16 %v1205
  %v1441 = vunpack.c.h.b16 %v1205
  %v1442 = vunpack.c.l.b16 %v1206
  %v1443 = vunpack.c.h.b16 %v1206
  %v1444 = vunpack.c.l.b16 %v1207
  %v1445 = vunpack.c.h.b16 %v1207
  %v1446 = vunpack.c.l.b16 %v1208
  %v1447 = vunpack.c.h.b16 %v1208
  %v1448 = vunpack.c.l.b16 %v1209
  %v1449 = vunpack.c.h.b16 %v1209
  %v1450 = vunpack.c.l.b16 %v1210
  %v1451 = vunpack.c.h.b16 %v1210
  %v1452 = vunpack.c.l.b16 %v1211
  %v1453 = vunpack.c.h.b16 %v1211
  %v1454 = vunpack.c.l.b16 %v1212
  %v1455 = vunpack.c.h.b16 %v1212
  %v1456 = vunpack.c.l.b16 %v1213
  %v1457 = vunpack.c.h.b16 %v1213
  %v1458 = vunpack.c.l.b16 %v1214
  %v1459 = vunpack.c.h.b16 %v1214
  %v1460 = vunpack.c.l.b16 %v1215
  %v1461 = vunpack.c.h.b16 %v1215
  %v1462 = vunpack.c.l.b16 %v1216
  %v1463 = vunpack.c.h.b16 %v1216
  %v1464 = vunpack.c.l.b16 %v1217
  %v1465 = vunpack.c.h.b16 %v1217
  %v1466 = vunpack.c.l.b16 %v1218
  %v1467 = vunpack.c.h.b16 %v1218
  %v1468 = vunpack.c.l.b16 %v1219
  %v1469 = vunpack.c.h.b16 %v1219
  %v1470 = vunpack.c.l.b16 %v1220
  %v1471 = vunpack.c.h.b16 %v1220
  %v1472 = vunpack.c.l.b16 %v1221
  %v1473 = vunpack.c.h.b16 %v1221
  %v1474 = vunpack.c.l.b16 %v1222
  %v1475 = vunpack.c.h.b16 %v1222
  %v1476 = vunpack.c.l.b16 %v1223
  %v1477 = vunpack.c.h.b16 %v1223
  %v1478 = vunpack.c.l.b16 %v1224
  %v1479 = vunpack.c.h.b16 %v1224
  %v1480 = vunpack.c.l.b16 %v1225
  %v1481 = vunpack.c.h.b16 %v1225
  %v1482 = vunpack.c.l.b16 %v1226
  %v1483 = vunpack.c.h.b16 %v1226
  %v1484 = vunpack.c.l.b16 %v1227
  %v1485 = vunpack.c.h.b16 %v1227
  %v1486 = vunpack.c.l.b16 %v1228
  %v1487 = vunpack.c.h.b16 %v1228
  %v1488 = vunpack.c.l.b16 %v1229
  %v1489 = vunpack.c.h.b16 %v1229
  %v1490 = vunpack.c.l.b16 %v1230
  %v1491 = vunpack.c.h.b16 %v1230
  %v1492 = vunpack.c.l.b16 %v1231
  %v1493 = vunpack.c.h.b16 %v1231
  %v1494 = vunpack.c.l.b16 %v1232
  %v1495 = vunpack.c.h.b16 %v1232
  %v1496 = vunpack.c.l.b16 %v1233
  %v1497 = vunpack.c.h.b16 %v1233
  %v1498 = vunpack.c.l.b16 %v1234
  %v1499 = vunpack.c.h.b16 %v1234
  %v1500 = vunpack.c.l.b16 %v1235
  %v1501 = vunpack.c.h.b16 %v1235
  %v1502 = vunpack.c.l.b16 %v1236
  %v1503 = vunpack.c.h.b16 %v1236
  %v1504 = vunpack.c.l.b16 %v1237
  %v1505 = vunpack.c.h.b16 %v1237
  %v1506 = vunpack.c.l.b16 %v1238
  %v1507 = vunpack.c.h.b16 %v1238
  %v1508 = vunpack.c.l.b16 %v1239
  %v1509 = vunpack.c.h.b16 %v1239
  %v1510 = vunpack.c.l.b16 %v1240
  %v1511 = vunpack.c.h.b16 %v1240
  %v1512 = vunpack.c.l.b16 %v1241
  %v1513 = vunpack.c.h.b16 %v1241
  %v1514 = vunpack.c.l.b16 %v1242
  %v1515 = vunpack.c.h.b16 %v1242
  %v1516 = vunpack.c.l.b16 %v1243
  %v1517 = vunpack.c.h.b16 %v1243
  %v1518 = vunpack.c.l.b16 %v1244
  %v1519 = vunpack.c.h.b16 %v1244
  %v1520 = vunpack.c.l.b16 %v1245
  %v1521 = vunpack.c.h.b16 %v1245
  %v1522 = vunpack.c.l.b16 %v1246
  %v1523 = vunpack.c.h.b16 %v1246
  %v1524 = vunpack.c.l.b16 %v1247
  %v1525 = vunpack.c.h.b16 %v1247
  %v1526 = vunpack.c.l.b16 %v1248
  %v1527 = vunpack.c.h.b16 %v1248
  %v1528 = vunpack.c.l.b16 %v1249
  %v1529 = vunpack.c.h.b16 %v1249
  %v1530 = vunpack.c.l.b16 %v1250
  %v1531 = vunpack.c.h.b16 %v1250
  %v1532 = vunpack.c.l.b16 %v1251
  %v1533 = vunpack.c.h.b16 %v1251
  %v1534 = vunpack.c.l.b16 %v1252
  %v1535 = vunpack.c.h.b16 %v1252
  %v1536 = vunpack.c.l.b16 %v1253
  %v1537 = vunpack.c.h.b16 %v1253
  %v1538 = vunpack.c.l.b16 %v1254
  %v1539 = vunpack.c.h.b16 %v1254
  %v1540 = vunpack.c.l.b16 %v1255
  %v1541 = vunpack.c.h.b16 %v1255
  %v1542 = vunpack.c.l.b16 %v1256
  %v1543 = vunpack.c.h.b16 %v1256
  %v1544 = vunpack.c.l.b16 %v1257
  %v1545 = vunpack.c.h.b16 %v1257
  %v1546 = vunpack.c.l.b16 %v1258
  %v1547 = vunpack.c.h.b16 %v1258
  %v1548 = vunpack.c.l.b16 %v1259
  %v1549 = vunpack.c.h.b16 %v1259
  %v1550 = vunpack.c.l.b16 %v1260
  %v1551 = vunpack.c.h.b16 %v1260
  %v1552 = vunpack.c.l.b16 %v1261
  %v1553 = vunpack.c.h.b16 %v1261
  %v1554 = vunpack.c.l.b16 %v1262
  %v1555 = vunpack.c.h.b16 %v1262
  %v1556 = vunpack.c.l.b16 %v1263
  %v1557 = vunpack.c.h.b16 %v1263
  %v1558 = vunpack.c.l.b16 %v1264
  %v1559 = vunpack.c.h.b16 %v1264
  %v1560 = vunpack.c.l.b16 %v1265
  %v1561 = vunpack.c.h.b16 %v1265
  %v1562 = vunpack.c.l.b16 %v1266
  %v1563 = vunpack.c.h.b16 %v1266
  %v1564 = vunpack.c.l.b16 %v1267
  %v1565 = vunpack.c.h.b16 %v1267
  %v1566 = vunpack.c.l.b16 %v1268
  %v1567 = vunpack.c.h.b16 %v1268
  %v1568 = vunpack.c.l.b16 %v1269
  %v1569 = vunpack.c.h.b16 %v1269
  %v1570 = vunpack.c.l.b16 %v1270
  %v1571 = vunpack.c.h.b16 %v1270
  %v1572 = vunpack.c.l.b16 %v1271
  %v1573 = vunpack.c.h.b16 %v1271
  %v1574 = vpack.c.b16 %v1388, %v1382
  %v1575 = vpack.c.b16 %v1389, %v1383
  %v1576 = vpack.c.b16 %v1390, %v1384
  %v1577 = vpack.c.b16 %v1391, %v1385
  %v1578 = vpack.c.b16 %v1392, %v1386
  %v1579 = vpack.c.b16 %v1393, %v1387
  %v1580 = vpack.c.b16 %v1400, %v1394
  %v1581 = vpack.c.b16 %v1401, %v1395
  %v1582 = vpack.c.b16 %v1402, %v1396
  %v1583 = vpack.c.b16 %v1403, %v1397
  %v1584 = vpack.c.b16 %v1404, %v1398
  %v1585 = vpack.c.b16 %v1405, %v1399
  %v1586 = vpack.c.b16 %v1412, %v1406
  %v1587 = vpack.c.b16 %v1413, %v1407
  %v1588 = vpack.c.b16 %v1414, %v1408
  %v1589 = vpack.c.b16 %v1415, %v1409
  %v1590 = vpack.c.b16 %v1416, %v1410
  %v1591 = vpack.c.b16 %v1417, %v1411
  %v1592 = vpack.c.b16 %v1424, %v1418
  %v1593 = vpack.c.b16 %v1425, %v1419
  %v1594 = vpack.c.b16 %v1426, %v1420
  %v1595 = vpack.c.b16 %v1427, %v1421
  %v1596 = vpack.c.b16 %v1428, %v1422
  %v1597 = vpack.c.b16 %v1429, %v1423
  %v1598 = vpack.c.b16 %v1436, %v1430
  %v1599 = vpack.c.b16 %v1437, %v1431
  %v1600 = vpack.c.b16 %v1438, %v1432
  %v1601 = vpack.c.b16 %v1439, %v1433
  %v1602 = vpack.c.b16 %v1440, %v1434
  %v1603 = vpack.c.b16 %v1441, %v1435
  %v1604 = vpack.c.b16 %v1448, %v1442
  %v1605 = vpack.c.b16 %v1449, %v1443
  %v1606 = vpack.c.b16 %v1450, %v1444
  %v1607 = vpack.c.b16 %v1451, %v1445
  %v1608 = vpack.c.b16 %v1452, %v1446
  %v1609 = vpack.c.b16 %v1453, %v1447
  %v1610 = vpack.c.b16 %v1460, %v1454
  %v1611 = vpack.c.b16 %v1461, %v1455
  %v1612 = vpack.c.b16 %v1462, %v1456
  %v1613 = vpack.c.b16 %v1463, %v1457
  %v1614 = vpack.c.b16 %v1464, %v1458
  %v1615 = vpack.c.b16 %v1465, %v1459
  %v1616 = vpack.c.b16 %v1472, %v1466
  %v1617 = vpack.c.b16 %v1473, %v1467
  %v1618 = vpack.c.b16 %v1474, %v1468
  %v1619 = vpack.c.b16 %v1475, %v1469
  %v1620 = vpack.c.b16 %v1476, %v1470
  %v1621 = vpack.c.b16 %v1477, %v1471
  %v1622 = vpack.c.b16 %v1484, %v1478
  %v1623 = vpack.c.b16 %v1485, %v1479
  %v1624 = vpack.c.b16 %v1486, %v1480
  %v1625 = vpack.c.b16 %v1487, %v1481
  %v1626 = vpack.c.b16 %v1488, %v1482
  %v1627 = vpack.c.b16 %v1489, %v1483
  %v1628 = vpack.c.b16 %v1496, %v1490
  %v1629 = vpack.c.b16 %v1497, %v1491
  %v1630 = vpack.c.b16 %v1498, %v1492
  %v1631 = vpack.c.b16 %v1499, %v1493
  %v1632 = vpack.c.b16 %v1500, %v1494
  %v1633 = vpack.c.b16 %v1501, %v1495
  %v1634 = vpack.c.b16 %v1508, %v1502
  %v1635 = vpack.c.b16 %v1509, %v1503
  %v1636 = vpack.c.b16 %v1510, %v1504
  %v1637 = vpack.c.b16 %v1511, %v1505
  %v1638 = vpack.c.b16 %v1512, %v1506
  %v1639 = vpack.c.b16 %v1513, %v1507
  %v1640 = vpack.c.b16 %v1520, %v1514
  %v1641 = vpack.c.b16 %v1521, %v1515
  %v1642 = vpack.c.b16 %v1522, %v1516
  %v1643 = vpack.c.b16 %v1523, %v1517
  %v1644 = vpack.c.b16 %v1524, %v1518
  %v1645 = vpack.c.b16 %v1525, %v1519
  %v1646 = vpack.c.b16 %v1532, %v1526
  %v1647 = vpack.c.b16 %v1533, %v1527
  %v1648 = vpack.c.b16 %v1534, %v1528
  %v1649 = vpack.c.b16 %v1535, %v1529
  %v1650 = vpack.c.b16 %v1536, %v1530
  %v1651 = vpack.c.b16 %v1537, %v1531
  %v1652 = vpack.c.b16 %v1544, %v1538
  %v1653 = vpack.c.b16 %v1545, %v1539
  %v1654 = vpack.c.b16 %v1546, %v1540
  %v1655 = vpack.c.b16 %v1547, %v1541
  %v1656 = vpack.c.b16 %v1548, %v1542
  %v1657 = vpack.c.b16 %v1549, %v1543
  %v1658 = vpack.c.b16 %v1556, %v1550
  %v1659 = vpack.c.b16 %v1557, %v1551
  %v1660 = vpack.c.b16 %v1558, %v1552
  %v1661 = vpack.c.b16 %v1559, %v1553
  %v1662 = vpack.c.b16 %v1560, %v1554
  %v1663 = vpack.c.b16 %v1561, %v1555
  %v1664 = vpack.c.b16 %v1568, %v1562
  %v1665 = vpack.c.b16 %v1569, %v1563
  %v1666 = vpack.c.b16 %v1570, %v1564
  %v1667 = vpack.c.b16 %v1571, %v1565
  %v1668 = vpack.c.b16 %v1572, %v1566
  %v1669 = vpack.c.b16 %v1573, %v1567
  %1766 = vmatpush.bf16.msra.mxu0 %v1616
  %1767 = vmatpush.bf16.msra.mxu0 %v1610
  %1768 = vmatpush.bf16.msra.mxu0 %v1604
  %1769 = vmatpush.bf16.msra.mxu0 %v1598
  %1770 = vmatpush.bf16.msra.mxu0 %v1592
  %1771 = vmatpush.bf16.msra.mxu0 %v1586
  %1772 = vmatpush.bf16.msra.mxu0 %v1580
  %1773 = vmatpush.bf16.msra.mxu0 %v1574
  %1774 = vmatmul.bf16.gmra.mxu0 %v1174
  %v1775 = vpop.f32.mrf.mxu0
  %v1776 = vadd.f32 %v1274, %v1775
  %v1777 = vpop.f32.mrf.mxu0
  %1778 = vdwg.mxu0
  %1779 = vmatpush.bf16.msra.mxu0 %v1664
  %1780 = vmatpush.bf16.msra.mxu0 %v1658
  %1781 = vmatpush.bf16.msra.mxu0 %v1652
  %1782 = vmatpush.bf16.msra.mxu0 %v1646
  %1783 = vmatpush.bf16.msra.mxu0 %v1640
  %1784 = vmatpush.bf16.msra.mxu0 %v1634
  %1785 = vmatpush.bf16.msra.mxu0 %v1628
  %1786 = vmatpush.bf16.msra.mxu0 %v1622
  %1787 = vmatmul.bf16.gmra.mxu0 %v1175
  %v1788 = vpop.f32.mrf.mxu0
  %v1789 = vadd.f32 %v1776, %v1788
  %v1790 = vpop.f32.mrf.mxu0
  %1791 = vdwg.mxu0
  %1792 = vmatpush.bf16.msra.mxu0 %v1617
  %1793 = vmatpush.bf16.msra.mxu0 %v1611
  %1794 = vmatpush.bf16.msra.mxu0 %v1605
  %1795 = vmatpush.bf16.msra.mxu0 %v1599
  %1796 = vmatpush.bf16.msra.mxu0 %v1593
  %1797 = vmatpush.bf16.msra.mxu0 %v1587
  %1798 = vmatpush.bf16.msra.mxu0 %v1581
  %1799 = vmatpush.bf16.msra.mxu0 %v1575
  %1800 = vmatmul.bf16.gmra.mxu0 %v1174
  %v1801 = vpop.f32.mrf.mxu0
  %v1802 = vadd.f32 %v1275, %v1801
  %v1803 = vpop.f32.mrf.mxu0
  %1804 = vdwg.mxu0
  %1805 = vmatpush.bf16.msra.mxu0 %v1665
  %1806 = vmatpush.bf16.msra.mxu0 %v1659
  %1807 = vmatpush.bf16.msra.mxu0 %v1653
  %1808 = vmatpush.bf16.msra.mxu0 %v1647
  %1809 = vmatpush.bf16.msra.mxu0 %v1641
  %1810 = vmatpush.bf16.msra.mxu0 %v1635
  %1811 = vmatpush.bf16.msra.mxu0 %v1629
  %1812 = vmatpush.bf16.msra.mxu0 %v1623
  %1813 = vmatmul.bf16.gmra.mxu0 %v1175
  %v1814 = vpop.f32.mrf.mxu0
  %v1815 = vadd.f32 %v1802, %v1814
  %v1816 = vpop.f32.mrf.mxu0
  %1817 = vdwg.mxu0
  %1818 = vmatpush.bf16.msra.mxu0 %v1618
  %1819 = vmatpush.bf16.msra.mxu0 %v1612
  %1820 = vmatpush.bf16.msra.mxu0 %v1606
  %1821 = vmatpush.bf16.msra.mxu0 %v1600
  %1822 = vmatpush.bf16.msra.mxu0 %v1594
  %1823 = vmatpush.bf16.msra.mxu0 %v1588
  %1824 = vmatpush.bf16.msra.mxu0 %v1582
  %1825 = vmatpush.bf16.msra.mxu0 %v1576
  %1826 = vmatmul.bf16.gmra.mxu0 %v1174
  %v1827 = vpop.f32.mrf.mxu0
  %v1828 = vadd.f32 %v1276, %v1827
  %v1829 = vpop.f32.mrf.mxu0
  %1830 = vdwg.mxu0
  %1831 = vmatpush.bf16.msra.mxu0 %v1666
  %1832 = vmatpush.bf16.msra.mxu0 %v1660
  %1833 = vmatpush.bf16.msra.mxu0 %v1654
  %1834 = vmatpush.bf16.msra.mxu0 %v1648
  %1835 = vmatpush.bf16.msra.mxu0 %v1642
  %1836 = vmatpush.bf16.msra.mxu0 %v1636
  %1837 = vmatpush.bf16.msra.mxu0 %v1630
  %1838 = vmatpush.bf16.msra.mxu0 %v1624
  %1839 = vmatmul.bf16.gmra.mxu0 %v1175
  %v1840 = vpop.f32.mrf.mxu0
  %v1841 = vadd.f32 %v1828, %v1840
  %v1842 = vpop.f32.mrf.mxu0
  %1843 = vdwg.mxu0
  %1844 = vmatpush.bf16.msra.mxu0 %v1619
  %1845 = vmatpush.bf16.msra.mxu0 %v1613
  %1846 = vmatpush.bf16.msra.mxu0 %v1607
  %1847 = vmatpush.bf16.msra.mxu0 %v1601
  %1848 = vmatpush.bf16.msra.mxu0 %v1595
  %1849 = vmatpush.bf16.msra.mxu0 %v1589
  %1850 = vmatpush.bf16.msra.mxu0 %v1583
  %1851 = vmatpush.bf16.msra.mxu0 %v1577
  %1852 = vmatmul.bf16.gmra.mxu0 %v1174
  %v1853 = vpop.f32.mrf.mxu0
  %v1854 = vadd.f32 %v1277, %v1853
  %v1855 = vpop.f32.mrf.mxu0
  %1856 = vdwg.mxu0
  %1857 = vmatpush.bf16.msra.mxu0 %v1667
  %1858 = vmatpush.bf16.msra.mxu0 %v1661
  %1859 = vmatpush.bf16.msra.mxu0 %v1655
  %1860 = vmatpush.bf16.msra.mxu0 %v1649
  %1861 = vmatpush.bf16.msra.mxu0 %v1643
  %1862 = vmatpush.bf16.msra.mxu0 %v1637
  %1863 = vmatpush.bf16.msra.mxu0 %v1631
  %1864 = vmatpush.bf16.msra.mxu0 %v1625
  %1865 = vmatmul.bf16.gmra.mxu0 %v1175
  %v1866 = vpop.f32.mrf.mxu0
  %v1867 = vadd.f32 %v1854, %v1866
  %v1868 = vpop.f32.mrf.mxu0
  %1869 = vdwg.mxu0
  %1870 = vmatpush.bf16.msra.mxu0 %v1620
  %1871 = vmatpush.bf16.msra.mxu0 %v1614
  %1872 = vmatpush.bf16.msra.mxu0 %v1608
  %1873 = vmatpush.bf16.msra.mxu0 %v1602
  %1874 = vmatpush.bf16.msra.mxu0 %v1596
  %1875 = vmatpush.bf16.msra.mxu0 %v1590
  %1876 = vmatpush.bf16.msra.mxu0 %v1584
  %1877 = vmatpush.bf16.msra.mxu0 %v1578
  %1878 = vmatmul.bf16.gmra.mxu0 %v1174
  %v1879 = vpop.f32.mrf.mxu0
  %v1880 = vadd.f32 %v1278, %v1879
  %v1881 = vpop.f32.mrf.mxu0
  %1882 = vdwg.mxu0
  %1883 = vmatpush.bf16.msra.mxu0 %v1668
  %1884 = vmatpush.bf16.msra.mxu0 %v1662
  %1885 = vmatpush.bf16.msra.mxu0 %v1656
  %1886 = vmatpush.bf16.msra.mxu0 %v1650
  %1887 = vmatpush.bf16.msra.mxu0 %v1644
  %1888 = vmatpush.bf16.msra.mxu0 %v1638
  %1889 = vmatpush.bf16.msra.mxu0 %v1632
  %1890 = vmatpush.bf16.msra.mxu0 %v1626
  %1891 = vmatmul.bf16.gmra.mxu0 %v1175
  %v1892 = vpop.f32.mrf.mxu0
  %v1893 = vadd.f32 %v1880, %v1892
  %v1894 = vpop.f32.mrf.mxu0
  %1895 = vdwg.mxu0
  %1896 = vmatpush.bf16.msra.mxu0 %v1621
  %1897 = vmatpush.bf16.msra.mxu0 %v1615
  %1898 = vmatpush.bf16.msra.mxu0 %v1609
  %1899 = vmatpush.bf16.msra.mxu0 %v1603
  %1900 = vmatpush.bf16.msra.mxu0 %v1597
  %1901 = vmatpush.bf16.msra.mxu0 %v1591
  %1902 = vmatpush.bf16.msra.mxu0 %v1585
  %1903 = vmatpush.bf16.msra.mxu0 %v1579
  %1904 = vmatmul.bf16.gmra.mxu0 %v1174
  %v1905 = vpop.f32.mrf.mxu0
  %v1906 = vadd.f32 %v1279, %v1905
  %v1907 = vpop.f32.mrf.mxu0
  %1908 = vdwg.mxu0
  %1909 = vmatpush.bf16.msra.mxu0 %v1669
  %1910 = vmatpush.bf16.msra.mxu0 %v1663
  %1911 = vmatpush.bf16.msra.mxu0 %v1657
  %1912 = vmatpush.bf16.msra.mxu0 %v1651
  %1913 = vmatpush.bf16.msra.mxu0 %v1645
  %1914 = vmatpush.bf16.msra.mxu0 %v1639
  %1915 = vmatpush.bf16.msra.mxu0 %v1633
  %1916 = vmatpush.bf16.msra.mxu0 %v1627
  %1917 = vmatmul.bf16.gmra.mxu0 %v1175
  %v1918 = vpop.f32.mrf.mxu0
  %v1919 = vadd.f32 %v1906, %v1918
  %v1920 = vpop.f32.mrf.mxu0
  %1921 = vdwg.mxu0
  %v1922 = vsub.f32 0.0, %v1789
  %v1923 = vsub.f32 0.0, %v1815
  %v1924 = vsub.f32 0.0, %v1841
  %v1925 = vsub.f32 0.0, %v1867
  %v1926 = vsub.f32 0.0, %v1893
  %v1927 = vsub.f32 0.0, %v1919
  %v1928 = vmul.f32 %v1922, 1.442695
  %v1929 = vpow.pop %v1928
  %v1930 = vmul.f32 %v1923, 1.442695
  %v1931 = vpow.pop %v1930
  %v1932 = vmul.f32 %v1924, 1.442695
  %v1933 = vpow.pop %v1932
  %v1934 = vmul.f32 %v1925, 1.442695
  %v1935 = vpow.pop %v1934
  %v1936 = vmul.f32 %v1926, 1.442695
  %v1937 = vpow.pop %v1936
  %v1938 = vmul.f32 %v1927, 1.442695
  %v1939 = vpow.pop %v1938
  %v1940 = vadd.f32 %v1929, 1.0
  %v1941 = vadd.f32 %v1931, 1.0
  %v1942 = vadd.f32 %v1933, 1.0
  %v1943 = vadd.f32 %v1935, 1.0
  %v1944 = vadd.f32 %v1937, 1.0
  %v1945 = vadd.f32 %v1939, 1.0
  %v1946 = vrcp.pop %v1940
  %v1947 = vrcp.pop %v1941
  %v1948 = vrcp.pop %v1942
  %v1949 = vrcp.pop %v1943
  %v1950 = vrcp.pop %v1944
  %v1951 = vrcp.pop %v1945
  %1952 = vst [vmem:[%s13] sm:$0xff] %v1946
  %1953 = vst [vmem:[%s13 + $0x8] sm:$0xff] %v1947
  %1954 = vst [vmem:[%s13 + $0x10] sm:$0xff] %v1948
  %1955 = vst [vmem:[%s13 + $0x18] sm:$0xff] %v1949
  %1956 = vst [vmem:[%s13 + $0x20] sm:$0xff] %v1950
  %1957 = vst [vmem:[%s13 + $0x28] sm:$0xff] %v1951
  // Predicated region
  $region54: #{vae_forward.1} parent=0 // pred_check
    _
  $region55: #{vae_forward.1} parent=0 // pred_check_branch
    %1959 = sbr.rel (0) target = $region57
  $region56: #{vae_forward.1} parent=0 // pred_region
    _
  $region57: #{vae_forward.1} parent=0 // pred_fallthru
    _
  // Predicated region
  $region58: #{vae_forward.1} parent=0 // pred_check
    _
  $region59: #{vae_forward.1} parent=0 // pred_check_branch
    %1961 = sbr.rel (0) target = $region61
  $region60: #{vae_forward.1} parent=0 // pred_region
    _
  $region61: #{vae_forward.1} parent=0 // pred_fallthru
    _
  // Predicated region
  $region62: #{vae_forward.1} parent=0 // pred_check
    _
  $region63: #{vae_forward.1} parent=0 // pred_check_branch
    %1963 = sbr.rel (0) target = $region65
  $region64: #{vae_forward.1} parent=0 // pred_region
    _
  $region65: #{vae_forward.1} parent=0 // pred_fallthru
    _
  // Predicated region
  $region66: #{vae_forward.1} parent=0 // pred_check
    _
  $region67: #{vae_forward.1} parent=0 // pred_check_branch
    %1965 = sbr.rel (0) target = $region69
  $region68: #{vae_forward.1} parent=0 // pred_region
    _
  $region69: #{vae_forward.1} parent=0 // pred_fallthru
    _

</llo_original>
